<compile_context>
chip_gen: v7x
topology: tpu7x:2x2x1
jax: 0.10.0
libtpu: 0.0.40
codegen_flags: <defaults>
</compile_context>

<pallas_src>
import math
import functools

import jax
import jax.numpy as jnp
import numpy as np
from jax.experimental import pallas as pl
from jax.experimental.pallas import tpu as pltpu


# --------------------------- Fused forward kernel ---------------------------
def _fused_kernel(x_ref, wih_ref, whh_ref, bias_ref, resw_ref, resb_ref,
                  wqkv_ref, wm_ref, g_ref, be_ref, o_ref,
                  *, S, B, H, A, scale, lstm_on_raw_input):
    f32 = jnp.float32

    # ---- batched input load + residual projection (batch-major rows b*S+t) --
    x2 = jnp.concatenate([x_ref[b].astype(f32) for b in range(B)], axis=0)   # (B*S, Din)
    x_res = (jnp.dot(x2, resw_ref[...], preferred_element_type=f32)
             + resb_ref[...])                                                # (B*S, H)

    # ---- final-layer LSTM, batch-vectorized over B ---------------------------
    # Time-major copy of the LSTM input so every step's (B, d) rows are one
    # contiguous sublane slice (keeps the per-step gather off the serial chain).
    lstm_src = x2 if lstm_on_raw_input else x_res
    lstm_tm = jnp.concatenate(
        [lstm_src[b * S + t: b * S + t + 1, :] for t in range(S) for b in range(B)],
        axis=0)                                                              # (S*B, d)
    # Hoisted input projection: ONE matmul for the whole sequence & batch.
    # Gate columns were pre-permuted by the wrapper to [i | f | o | g].
    xw = (jnp.dot(lstm_tm, wih_ref[...], preferred_element_type=f32)
          + bias_ref[...])                                                   # (S*B, 4H)

    whh = whh_ref[...]                                                       # (H, 4H)
    # whh is loop-invariant across the unrolled steps, so Mosaic can keep it
    # staged in the MXU; explicit matmul_push_rhs/acc_lhs is avoided because
    # its pop/accumulate semantics differ across MRF (v5e/v6e) and MRB (v7x).
    h = jnp.zeros((B, H), f32)
    c = jnp.zeros((B, H), f32)
    hs = []
    for t in range(S):                      # static unroll: true serial dependence
        gates = xw[t * B:(t + 1) * B, :] + jnp.dot(h, whh,
                                                   preferred_element_type=f32)  # (B, 4H)
        sg = jax.nn.sigmoid(gates[:, 0:3 * H])        # sigma(i | f | o), one EUP push
        gg = jnp.tanh(gates[:, 3 * H:4 * H])          # tanh(g), one EUP push
        c = sg[:, H:2 * H] * c + sg[:, 0:H] * gg
        h = sg[:, 2 * H:3 * H] * jnp.tanh(c)
        hs.append(h)
    # Back to batch-major rows; hidden states never touch VMEM scratch.
    z = jnp.concatenate([hs[t][b:b + 1, :] for b in range(B) for t in range(S)],
                        axis=0)                                              # (B*S, H)

    # ---- add + LayerNorm, multi-head self-attention, add + LayerNorm --------
    gamma = g_ref[...]                                                       # (1, H)
    beta = be_ref[...]                                                       # (1, H)

    def layer_norm(v):                       # v: (B*S, H), normalize last dim
        mu = jnp.mean(v, axis=-1, keepdims=True)
        var = jnp.mean(jnp.square(v - mu), axis=-1, keepdims=True)
        return (v - mu) * jax.lax.rsqrt(var + 1e-5) * gamma + beta

    # z = ln(dropout(z) + x)      (dropout == identity, eval mode)
    u = layer_norm(z + x_res)                                                # (B*S, H)
    qkv = jnp.dot(u, wqkv_ref[...], preferred_element_type=f32)              # (B*S, 3A)
    heads = []
    for b in range(B):                       # tiny (S,S) scores, off the serial chain
        qb = qkv[b * S:(b + 1) * S, 0:A]
        kb = qkv[b * S:(b + 1) * S, A:2 * A]
        vb = qkv[b * S:(b + 1) * S, 2 * A:3 * A]
        s = jnp.dot(qb, kb.T, preferred_element_type=f32) * scale            # (S, S)
        s = s - jnp.max(s, axis=-1, keepdims=True)
        p = jnp.exp(s)
        p = p / jnp.sum(p, axis=-1, keepdims=True)                           # exact softmax
        heads.append(jnp.dot(p, vb, preferred_element_type=f32))             # (S, A)
    head2 = jnp.concatenate(heads, axis=0)                                   # (B*S, A)
    # All heads share one AttentionHead (ModuleList([head] * num_heads)), so
    # concat([head]*nh) @ Wm^T == head @ wm_eff (per-head slices summed).
    attn = jnp.dot(head2, wm_ref[...], preferred_element_type=f32)           # (B*S, H)
    # z = ln(dropout(attn) + z)
    zf = layer_norm(attn + u)

    # torch.mean(z, dim=0) fused into the epilogue; ONE lane-dense (B,H) store.
    out = jnp.concatenate(
        [jnp.mean(zf[b * S:(b + 1) * S, :], axis=0, keepdims=True) for b in range(B)],
        axis=0)
    o_ref[...] = out.astype(o_ref.dtype)


@functools.partial(jax.jit, static_argnames=("n_layers", "num_heads", "model_dim"))
def res_attn_lstm_forward(x, params, *, n_layers, num_heads, model_dim):
    # x: (B, S, input_dim), batch-first, as handed to the PyTorch module.
    B, S, D_in = x.shape
    H = model_dim
    A = params["wq"].shape[0]

    # Exact dead-code elimination: only the FINAL layer's LSTM weights (plus
    # the residual projection, computed from the original input at idx==0)
    # reach the output.  For n_layers == 1 the LSTM consumes the raw input.
    lp = params["lstms"][n_layers - 1]
    lstm_on_raw_input = (n_layers == 1)
    d_l = lp["w_ih"].shape[1]

    def reorder_gate_cols(wT):
        # PyTorch gate order along 4H is [i | f | g | o]; move to [i | f | o | g]
        # so the kernel applies sigmoid to one contiguous 3H slice and tanh to
        # the trailing H slice.
        return jnp.concatenate(
            [wT[:, 0:H], wT[:, H:2 * H], wT[:, 3 * H:4 * H], wT[:, 2 * H:3 * H]],
            axis=1)

    w_ihT = reorder_gate_cols(lp["w_ih"].T)                               # (d_l, 4H)
    w_hhT = reorder_gate_cols(lp["w_hh"].T)                               # (H, 4H)
    bias = reorder_gate_cols((lp["b_ih"] + lp["b_hh"]).reshape(1, 4 * H))  # (1, 4H)

    # Fused Q/K/V projection and folded multi-head output weight (ModuleList
    # repeats the SAME AttentionHead object -> all heads share weights).
    wqkvT = jnp.concatenate([params["wq"].T, params["wk"].T, params["wv"].T],
                            axis=1)                                       # (H, 3A)
    wm = params["wm"]
    wm_effT = sum(wm[:, h * A:(h + 1) * A] for h in range(num_heads)).T   # (A, H)

    inputs = [x, w_ihT, w_hhT, bias,
              params["res_w"].T, params["res_b"].reshape(1, H),
              wqkvT, wm_effT,
              params["ln_gamma"].reshape(1, H), params["ln_beta"].reshape(1, H)]
    in_specs = [pl.BlockSpec((B, S, D_in), lambda i: (0, 0, 0)),
                pl.BlockSpec((d_l, 4 * H), lambda i: (0, 0)),
                pl.BlockSpec((H, 4 * H), lambda i: (0, 0)),
                pl.BlockSpec((1, 4 * H), lambda i: (0, 0)),
                pl.BlockSpec((D_in, H), lambda i: (0, 0)),
                pl.BlockSpec((1, H), lambda i: (0, 0)),
                pl.BlockSpec((H, 3 * A), lambda i: (0, 0)),
                pl.BlockSpec((A, H), lambda i: (0, 0)),
                pl.BlockSpec((1, H), lambda i: (0, 0)),
                pl.BlockSpec((1, H), lambda i: (0, 0))]

    kernel = functools.partial(_fused_kernel, S=S, B=B, H=H, A=A,
                               scale=1.0 / math.sqrt(model_dim),
                               lstm_on_raw_input=lstm_on_raw_input)
    return pl.pallas_call(
        kernel,
        out_shape=jax.ShapeDtypeStruct((B, H), x.dtype),
        grid_spec=pltpu.PrefetchScalarGridSpec(
            num_scalar_prefetch=0,
            grid=(1,),
            in_specs=in_specs,
            out_specs=pl.BlockSpec((B, H), lambda i: (0, 0))),
        compiler_params=pltpu.CompilerParams(
            dimension_semantics=("arbitrary",)),
    )(*inputs)


# ----------------------------- Pure-JAX reference ----------------------------
# Runs EVERY layer exactly like the PyTorch module; matching against it proves
# the kernel's dead-layer elimination is semantics-preserving.
def reference_forward(x, params, *, n_layers, num_heads, model_dim):
    hp = jax.lax.Precision.HIGHEST

    def mm(a, b):
        return jnp.matmul(a, b, precision=hp)

    xt = jnp.transpose(x, (1, 0, 2))
    S, B, _ = xt.shape

    def lstm_ref(xs, w_ih, w_hh, b_ih, b_hh):
        H = w_hh.shape[1]

        def step(carry, x_t):
            h, c = carry
            gates = mm(x_t, w_ih.T) + mm(h, w_hh.T) + b_ih + b_hh
            i = jax.nn.sigmoid(gates[:, :H])
            f = jax.nn.sigmoid(gates[:, H:2 * H])
            g = jnp.tanh(gates[:, 2 * H:3 * H])
            o = jax.nn.sigmoid(gates[:, 3 * H:])
            c = f * c + i * g
            h = o * jnp.tanh(c)
            return (h, c), h

        init = (jnp.zeros((B, H), xs.dtype), jnp.zeros((B, H), xs.dtype))
        _, hs = jax.lax.scan(step, init, xs)
        return hs

    def ln(v, g, b):
        mu = jnp.mean(v, axis=-1, keepdims=True)
        var = jnp.mean(jnp.square(v - mu), axis=-1, keepdims=True)
        return (v - mu) * jax.lax.rsqrt(var + 1e-5) * g + b

    def attn_ref(zb):
        q = mm(zb, params["wq"].T)
        k = mm(zb, params["wk"].T)
        v = mm(zb, params["wv"].T)
        s = mm(q, jnp.swapaxes(k, 1, 2)) / math.sqrt(model_dim)
        p = jax.nn.softmax(s, axis=-1)
        head = mm(p, v)
        cat = jnp.concatenate([head] * num_heads, axis=-1)
        return mm(cat, params["wm"].T)

    z = None
    for idx in range(n_layers):
        lp = params["lstms"][idx]
        z = lstm_ref(xt, lp["w_ih"], lp["w_hh"], lp["b_ih"], lp["b_hh"])
        if idx == 0:
            xt = mm(xt, params["res_w"].T) + params["res_b"]
        z = z + xt
        zb = jnp.transpose(z, (1, 0, 2))
        zb = ln(zb, params["ln_gamma"], params["ln_beta"])
        zb = attn_ref(zb) + zb
        zb = ln(zb, params["ln_gamma"], params["ln_beta"])
        z = jnp.transpose(zb, (1, 0, 2))
    return jnp.mean(z, axis=0)


# --------------------------------- Param init --------------------------------
def init_params(key, input_dim, hidden_dim, n_layers, num_heads, attn_dim):
    def rnd(k, shape, scale=0.1):
        return scale * jax.random.normal(k, shape, jnp.float32)

    keys = list(jax.random.split(key, 4 * n_layers + 6))
    ki = iter(keys)
    lstms = []
    for i in range(n_layers):
        d_in = input_dim if i == 0 else hidden_dim
        lstms.append(dict(
            w_ih=rnd(next(ki), (4 * hidden_dim, d_in)),
            w_hh=rnd(next(ki), (4 * hidden_dim, hidden_dim)),
            b_ih=rnd(next(ki), (4 * hidden_dim,)),
            b_hh=rnd(next(ki), (4 * hidden_dim,)),
        ))
    params = dict(
        lstms=lstms,
        res_w=rnd(next(ki), (hidden_dim, input_dim)),
        res_b=rnd(next(ki), (hidden_dim,)),
        # attention weights — shared across layers and heads, exactly like the
        # PyTorch module (ModuleList repeats the same objects)
        wq=rnd(next(ki), (attn_dim, hidden_dim)),
        wk=rnd(next(ki), (attn_dim, hidden_dim)),
        wv=rnd(next(ki), (attn_dim, hidden_dim)),
        wm=rnd(next(ki), (hidden_dim, attn_dim * num_heads)),
        # single shared LayerNorm (PyTorch default init)
        ln_gamma=jnp.ones((hidden_dim,), jnp.float32),
        ln_beta=jnp.zeros((hidden_dim,), jnp.float32),
    )
    return params


if __name__ == "__main__":
    B, S = 2, 8
    input_dim, hidden_dim, n_layers = 16, 32, 2
    num_heads, attn_dim = 2, 16
    # bidirectional=False; dropout treated as identity (eval mode)
    # TODO(synk): stochastic dropout (training mode) not implemented in-kernel.

    key = jax.random.PRNGKey(0)
    pkey, xkey = jax.random.split(key)
    params = init_params(pkey, input_dim, hidden_dim, n_layers, num_heads, attn_dim)
    x = jax.random.normal(xkey, (B, S, input_dim), jnp.float32)

    out = res_attn_lstm_forward(x, params, n_layers=n_layers,
                                num_heads=num_heads, model_dim=hidden_dim)
    out = jax.block_until_ready(out)
    assert out.shape == (B, hidden_dim)

    ref = reference_forward(x, params, n_layers=n_layers,
                            num_heads=num_heads, model_dim=hidden_dim)
    ref = jax.block_until_ready(ref)
    np.testing.assert_allclose(np.asarray(out), np.asarray(ref),
                               atol=1e-2, rtol=1e-2)
    print("KERNEL_OK")
</pallas_src>

<mosaic_0001>
module attributes {stable_mosaic.version = 11 : i64} {
  func.func @_fused_kernel(%arg0: i32, %arg1: memref<2x8x16xf32, #tpu.memory_space<vmem>>, %arg2: memref<32x128xf32, #tpu.memory_space<vmem>>, %arg3: memref<32x128xf32, #tpu.memory_space<vmem>>, %arg4: memref<1x128xf32, #tpu.memory_space<vmem>>, %arg5: memref<16x32xf32, #tpu.memory_space<vmem>>, %arg6: memref<1x32xf32, #tpu.memory_space<vmem>>, %arg7: memref<32x48xf32, #tpu.memory_space<vmem>>, %arg8: memref<16x32xf32, #tpu.memory_space<vmem>>, %arg9: memref<1x32xf32, #tpu.memory_space<vmem>>, %arg10: memref<1x32xf32, #tpu.memory_space<vmem>>, %arg11: memref<2x32xf32, #tpu.memory_space<vmem>>) attributes {dimension_semantics = [#tpu.dimension_semantics<arbitrary>], iteration_bounds = array<i64: 1>, scalar_prefetch = 0 : i64, scratch_operands = 0 : i64, tpu.core_type = #tpu.core_type<tc>, window_params = [{pipeline_mode = #tpu.pipeline_mode<synchronous>, transform_indices = @transform_0, window_bounds = array<i64: 2, 8, 16>}, {pipeline_mode = #tpu.pipeline_mode<synchronous>, transform_indices = @transform_1, window_bounds = array<i64: 32, 128>}, {pipeline_mode = #tpu.pipeline_mode<synchronous>, transform_indices = @transform_2, window_bounds = array<i64: 32, 128>}, {pipeline_mode = #tpu.pipeline_mode<synchronous>, transform_indices = @transform_3, window_bounds = array<i64: 1, 128>}, {pipeline_mode = #tpu.pipeline_mode<synchronous>, transform_indices = @transform_4, window_bounds = array<i64: 16, 32>}, {pipeline_mode = #tpu.pipeline_mode<synchronous>, transform_indices = @transform_5, window_bounds = array<i64: 1, 32>}, {pipeline_mode = #tpu.pipeline_mode<synchronous>, transform_indices = @transform_6, window_bounds = array<i64: 32, 48>}, {pipeline_mode = #tpu.pipeline_mode<synchronous>, transform_indices = @transform_7, window_bounds = array<i64: 16, 32>}, {pipeline_mode = #tpu.pipeline_mode<synchronous>, transform_indices = @transform_8, window_bounds = array<i64: 1, 32>}, {pipeline_mode = #tpu.pipeline_mode<synchronous>, transform_indices = @transform_9, window_bounds = array<i64: 1, 32>}, {pipeline_mode = #tpu.pipeline_mode<synchronous>, transform_indices = @transform_10, window_bounds = array<i64: 2, 32>}]} {
    %c0 = arith.constant 0 : index
    %c0_0 = arith.constant 0 : index
    %c0_1 = arith.constant 0 : index
    %0 = vector.load %arg1[%c0, %c0_0, %c0_1] : memref<2x8x16xf32, #tpu.memory_space<vmem>>, vector<1x8x16xf32>
    %1 = vector.shape_cast %0 : vector<1x8x16xf32> to vector<8x16xf32>
    %c1 = arith.constant 1 : index
    %c0_2 = arith.constant 0 : index
    %c0_3 = arith.constant 0 : index
    %2 = vector.load %arg1[%c1, %c0_2, %c0_3] : memref<2x8x16xf32, #tpu.memory_space<vmem>>, vector<1x8x16xf32>
    %3 = vector.shape_cast %2 : vector<1x8x16xf32> to vector<8x16xf32>
    %4 = tpu.concatenate %1, %3 in 0 : vector<8x16xf32>, vector<8x16xf32> -> vector<16x16xf32>
    %c0_4 = arith.constant 0 : index
    %c0_5 = arith.constant 0 : index
    %5 = vector.load %arg5[%c0_4, %c0_5] : memref<16x32xf32, #tpu.memory_space<vmem>>, vector<16x32xf32>
    %cst = arith.constant dense<0.000000e+00> : vector<16x32xf32>
    %6 = tpu.matmul %4, %5, %cst {dimension_numbers = #tpu.dot_dimension_numbers<[1], [0], [0], [1], [0, 0, 1, 1], [], []>} : vector<16x16xf32>, vector<16x32xf32>, vector<16x32xf32> -> vector<16x32xf32>
    %c0_6 = arith.constant 0 : index
    %c0_7 = arith.constant 0 : index
    %7 = vector.load %arg6[%c0_6, %c0_7] : memref<1x32xf32, #tpu.memory_space<vmem>>, vector<1x32xf32>
    %8 = vector.broadcast %7 : vector<1x32xf32> to vector<16x32xf32>
    %9 = arith.addf %6, %8 : vector<16x32xf32>
    %10 = vector.extract_strided_slice %9 {offsets = [0, 0], sizes = [1, 32], strides = [1, 1]} : vector<16x32xf32> to vector<1x32xf32>
    %11 = vector.extract_strided_slice %9 {offsets = [8, 0], sizes = [1, 32], strides = [1, 1]} : vector<16x32xf32> to vector<1x32xf32>
    %12 = vector.extract_strided_slice %9 {offsets = [1, 0], sizes = [1, 32], strides = [1, 1]} : vector<16x32xf32> to vector<1x32xf32>
    %13 = vector.extract_strided_slice %9 {offsets = [9, 0], sizes = [1, 32], strides = [1, 1]} : vector<16x32xf32> to vector<1x32xf32>
    %14 = vector.extract_strided_slice %9 {offsets = [2, 0], sizes = [1, 32], strides = [1, 1]} : vector<16x32xf32> to vector<1x32xf32>
    %15 = vector.extract_strided_slice %9 {offsets = [10, 0], sizes = [1, 32], strides = [1, 1]} : vector<16x32xf32> to vector<1x32xf32>
    %16 = vector.extract_strided_slice %9 {offsets = [3, 0], sizes = [1, 32], strides = [1, 1]} : vector<16x32xf32> to vector<1x32xf32>
    %17 = vector.extract_strided_slice %9 {offsets = [11, 0], sizes = [1, 32], strides = [1, 1]} : vector<16x32xf32> to vector<1x32xf32>
    %18 = vector.extract_strided_slice %9 {offsets = [4, 0], sizes = [1, 32], strides = [1, 1]} : vector<16x32xf32> to vector<1x32xf32>
    %19 = vector.extract_strided_slice %9 {offsets = [12, 0], sizes = [1, 32], strides = [1, 1]} : vector<16x32xf32> to vector<1x32xf32>
    %20 = vector.extract_strided_slice %9 {offsets = [5, 0], sizes = [1, 32], strides = [1, 1]} : vector<16x32xf32> to vector<1x32xf32>
    %21 = vector.extract_strided_slice %9 {offsets = [13, 0], sizes = [1, 32], strides = [1, 1]} : vector<16x32xf32> to vector<1x32xf32>
    %22 = vector.extract_strided_slice %9 {offsets = [6, 0], sizes = [1, 32], strides = [1, 1]} : vector<16x32xf32> to vector<1x32xf32>
    %23 = vector.extract_strided_slice %9 {offsets = [14, 0], sizes = [1, 32], strides = [1, 1]} : vector<16x32xf32> to vector<1x32xf32>
    %24 = vector.extract_strided_slice %9 {offsets = [7, 0], sizes = [1, 32], strides = [1, 1]} : vector<16x32xf32> to vector<1x32xf32>
    %25 = vector.extract_strided_slice %9 {offsets = [15, 0], sizes = [1, 32], strides = [1, 1]} : vector<16x32xf32> to vector<1x32xf32>
    %26 = tpu.concatenate %10, %11, %12, %13, %14, %15, %16, %17, %18, %19, %20, %21, %22, %23, %24, %25 in 0 : vector<1x32xf32>, vector<1x32xf32>, vector<1x32xf32>, vector<1x32xf32>, vector<1x32xf32>, vector<1x32xf32>, vector<1x32xf32>, vector<1x32xf32>, vector<1x32xf32>, vector<1x32xf32>, vector<1x32xf32>, vector<1x32xf32>, vector<1x32xf32>, vector<1x32xf32>, vector<1x32xf32>, vector<1x32xf32> -> vector<16x32xf32>
    %c0_8 = arith.constant 0 : index
    %c0_9 = arith.constant 0 : index
    %27 = vector.load %arg2[%c0_8, %c0_9] : memref<32x128xf32, #tpu.memory_space<vmem>>, vector<32x128xf32>
    %cst_10 = arith.constant dense<0.000000e+00> : vector<16x128xf32>
    %28 = tpu.matmul %26, %27, %cst_10 {dimension_numbers = #tpu.dot_dimension_numbers<[1], [0], [0], [1], [0, 0, 1, 1], [], []>} : vector<16x32xf32>, vector<32x128xf32>, vector<16x128xf32> -> vector<16x128xf32>
    %c0_11 = arith.constant 0 : index
    %c0_12 = arith.constant 0 : index
    %29 = vector.load %arg4[%c0_11, %c0_12] : memref<1x128xf32, #tpu.memory_space<vmem>>, vector<1x128xf32>
    %30 = vector.broadcast %29 : vector<1x128xf32> to vector<16x128xf32>
    %31 = arith.addf %28, %30 : vector<16x128xf32>
    %c0_13 = arith.constant 0 : index
    %c0_14 = arith.constant 0 : index
    %32 = vector.load %arg3[%c0_13, %c0_14] : memref<32x128xf32, #tpu.memory_space<vmem>>, vector<32x128xf32>
    %cst_15 = arith.constant 0.000000e+00 : f32
    %33 = vector.broadcast %cst_15 : f32 to vector<2x32xf32>
    %cst_16 = arith.constant 0.000000e+00 : f32
    %34 = vector.broadcast %cst_16 : f32 to vector<2x32xf32>
    %35 = vector.extract_strided_slice %31 {offsets = [0, 0], sizes = [2, 128], strides = [1, 1]} : vector<16x128xf32> to vector<2x128xf32>
    %cst_17 = arith.constant dense<0.000000e+00> : vector<2x128xf32>
    %36 = tpu.matmul %33, %32, %cst_17 {dimension_numbers = #tpu.dot_dimension_numbers<[1], [0], [0], [1], [0, 0, 1, 1], [], []>} : vector<2x32xf32>, vector<32x128xf32>, vector<2x128xf32> -> vector<2x128xf32>
    %37 = arith.addf %35, %36 : vector<2x128xf32>
    %38 = vector.extract_strided_slice %37 {offsets = [0, 0], sizes = [2, 96], strides = [1, 1]} : vector<2x128xf32> to vector<2x96xf32>
    %39 = arith.negf %38 : vector<2x96xf32>
    %40 = math.exp %39 : vector<2x96xf32>
    %cst_18 = arith.constant 1.000000e+00 : f32
    %41 = vector.broadcast %cst_18 : f32 to vector<2x96xf32>
    %42 = arith.addf %41, %40 : vector<2x96xf32>
    %43 = arith.divf %41, %42 : vector<2x96xf32>
    %44 = vector.extract_strided_slice %37 {offsets = [0, 96], sizes = [2, 32], strides = [1, 1]} : vector<2x128xf32> to vector<2x32xf32>
    %45 = math.tanh %44 : vector<2x32xf32>
    %46 = vector.extract_strided_slice %43 {offsets = [0, 32], sizes = [2, 32], strides = [1, 1]} : vector<2x96xf32> to vector<2x32xf32>
    %47 = arith.mulf %46, %34 : vector<2x32xf32>
    %48 = vector.extract_strided_slice %43 {offsets = [0, 0], sizes = [2, 32], strides = [1, 1]} : vector<2x96xf32> to vector<2x32xf32>
    %49 = arith.mulf %48, %45 : vector<2x32xf32>
    %50 = arith.addf %47, %49 : vector<2x32xf32>
    %51 = vector.extract_strided_slice %43 {offsets = [0, 64], sizes = [2, 32], strides = [1, 1]} : vector<2x96xf32> to vector<2x32xf32>
    %52 = math.tanh %50 : vector<2x32xf32>
    %53 = arith.mulf %51, %52 : vector<2x32xf32>
    %54 = vector.extract_strided_slice %31 {offsets = [2, 0], sizes = [2, 128], strides = [1, 1]} : vector<16x128xf32> to vector<2x128xf32>
    %cst_19 = arith.constant dense<0.000000e+00> : vector<2x128xf32>
    %55 = tpu.matmul %53, %32, %cst_19 {dimension_numbers = #tpu.dot_dimension_numbers<[1], [0], [0], [1], [0, 0, 1, 1], [], []>} : vector<2x32xf32>, vector<32x128xf32>, vector<2x128xf32> -> vector<2x128xf32>
    %56 = arith.addf %54, %55 : vector<2x128xf32>
    %57 = vector.extract_strided_slice %56 {offsets = [0, 0], sizes = [2, 96], strides = [1, 1]} : vector<2x128xf32> to vector<2x96xf32>
    %58 = arith.negf %57 : vector<2x96xf32>
    %59 = math.exp %58 : vector<2x96xf32>
    %cst_20 = arith.constant 1.000000e+00 : f32
    %60 = vector.broadcast %cst_20 : f32 to vector<2x96xf32>
    %61 = arith.addf %60, %59 : vector<2x96xf32>
    %62 = arith.divf %60, %61 : vector<2x96xf32>
    %63 = vector.extract_strided_slice %56 {offsets = [0, 96], sizes = [2, 32], strides = [1, 1]} : vector<2x128xf32> to vector<2x32xf32>
    %64 = math.tanh %63 : vector<2x32xf32>
    %65 = vector.extract_strided_slice %62 {offsets = [0, 32], sizes = [2, 32], strides = [1, 1]} : vector<2x96xf32> to vector<2x32xf32>
    %66 = arith.mulf %65, %50 : vector<2x32xf32>
    %67 = vector.extract_strided_slice %62 {offsets = [0, 0], sizes = [2, 32], strides = [1, 1]} : vector<2x96xf32> to vector<2x32xf32>
    %68 = arith.mulf %67, %64 : vector<2x32xf32>
    %69 = arith.addf %66, %68 : vector<2x32xf32>
    %70 = vector.extract_strided_slice %62 {offsets = [0, 64], sizes = [2, 32], strides = [1, 1]} : vector<2x96xf32> to vector<2x32xf32>
    %71 = math.tanh %69 : vector<2x32xf32>
    %72 = arith.mulf %70, %71 : vector<2x32xf32>
    %73 = vector.extract_strided_slice %31 {offsets = [4, 0], sizes = [2, 128], strides = [1, 1]} : vector<16x128xf32> to vector<2x128xf32>
    %cst_21 = arith.constant dense<0.000000e+00> : vector<2x128xf32>
    %74 = tpu.matmul %72, %32, %cst_21 {dimension_numbers = #tpu.dot_dimension_numbers<[1], [0], [0], [1], [0, 0, 1, 1], [], []>} : vector<2x32xf32>, vector<32x128xf32>, vector<2x128xf32> -> vector<2x128xf32>
    %75 = arith.addf %73, %74 : vector<2x128xf32>
    %76 = vector.extract_strided_slice %75 {offsets = [0, 0], sizes = [2, 96], strides = [1, 1]} : vector<2x128xf32> to vector<2x96xf32>
    %77 = arith.negf %76 : vector<2x96xf32>
    %78 = math.exp %77 : vector<2x96xf32>
    %cst_22 = arith.constant 1.000000e+00 : f32
    %79 = vector.broadcast %cst_22 : f32 to vector<2x96xf32>
    %80 = arith.addf %79, %78 : vector<2x96xf32>
    %81 = arith.divf %79, %80 : vector<2x96xf32>
    %82 = vector.extract_strided_slice %75 {offsets = [0, 96], sizes = [2, 32], strides = [1, 1]} : vector<2x128xf32> to vector<2x32xf32>
    %83 = math.tanh %82 : vector<2x32xf32>
    %84 = vector.extract_strided_slice %81 {offsets = [0, 32], sizes = [2, 32], strides = [1, 1]} : vector<2x96xf32> to vector<2x32xf32>
    %85 = arith.mulf %84, %69 : vector<2x32xf32>
    %86 = vector.extract_strided_slice %81 {offsets = [0, 0], sizes = [2, 32], strides = [1, 1]} : vector<2x96xf32> to vector<2x32xf32>
    %87 = arith.mulf %86, %83 : vector<2x32xf32>
    %88 = arith.addf %85, %87 : vector<2x32xf32>
    %89 = vector.extract_strided_slice %81 {offsets = [0, 64], sizes = [2, 32], strides = [1, 1]} : vector<2x96xf32> to vector<2x32xf32>
    %90 = math.tanh %88 : vector<2x32xf32>
    %91 = arith.mulf %89, %90 : vector<2x32xf32>
    %92 = vector.extract_strided_slice %31 {offsets = [6, 0], sizes = [2, 128], strides = [1, 1]} : vector<16x128xf32> to vector<2x128xf32>
    %cst_23 = arith.constant dense<0.000000e+00> : vector<2x128xf32>
    %93 = tpu.matmul %91, %32, %cst_23 {dimension_numbers = #tpu.dot_dimension_numbers<[1], [0], [0], [1], [0, 0, 1, 1], [], []>} : vector<2x32xf32>, vector<32x128xf32>, vector<2x128xf32> -> vector<2x128xf32>
    %94 = arith.addf %92, %93 : vector<2x128xf32>
    %95 = vector.extract_strided_slice %94 {offsets = [0, 0], sizes = [2, 96], strides = [1, 1]} : vector<2x128xf32> to vector<2x96xf32>
    %96 = arith.negf %95 : vector<2x96xf32>
    %97 = math.exp %96 : vector<2x96xf32>
    %cst_24 = arith.constant 1.000000e+00 : f32
    %98 = vector.broadcast %cst_24 : f32 to vector<2x96xf32>
    %99 = arith.addf %98, %97 : vector<2x96xf32>
    %100 = arith.divf %98, %99 : vector<2x96xf32>
    %101 = vector.extract_strided_slice %94 {offsets = [0, 96], sizes = [2, 32], strides = [1, 1]} : vector<2x128xf32> to vector<2x32xf32>
    %102 = math.tanh %101 : vector<2x32xf32>
    %103 = vector.extract_strided_slice %100 {offsets = [0, 32], sizes = [2, 32], strides = [1, 1]} : vector<2x96xf32> to vector<2x32xf32>
    %104 = arith.mulf %103, %88 : vector<2x32xf32>
    %105 = vector.extract_strided_slice %100 {offsets = [0, 0], sizes = [2, 32], strides = [1, 1]} : vector<2x96xf32> to vector<2x32xf32>
    %106 = arith.mulf %105, %102 : vector<2x32xf32>
    %107 = arith.addf %104, %106 : vector<2x32xf32>
    %108 = vector.extract_strided_slice %100 {offsets = [0, 64], sizes = [2, 32], strides = [1, 1]} : vector<2x96xf32> to vector<2x32xf32>
    %109 = math.tanh %107 : vector<2x32xf32>
    %110 = arith.mulf %108, %109 : vector<2x32xf32>
    %111 = vector.extract_strided_slice %31 {offsets = [8, 0], sizes = [2, 128], strides = [1, 1]} : vector<16x128xf32> to vector<2x128xf32>
    %cst_25 = arith.constant dense<0.000000e+00> : vector<2x128xf32>
    %112 = tpu.matmul %110, %32, %cst_25 {dimension_numbers = #tpu.dot_dimension_numbers<[1], [0], [0], [1], [0, 0, 1, 1], [], []>} : vector<2x32xf32>, vector<32x128xf32>, vector<2x128xf32> -> vector<2x128xf32>
    %113 = arith.addf %111, %112 : vector<2x128xf32>
    %114 = vector.extract_strided_slice %113 {offsets = [0, 0], sizes = [2, 96], strides = [1, 1]} : vector<2x128xf32> to vector<2x96xf32>
    %115 = arith.negf %114 : vector<2x96xf32>
    %116 = math.exp %115 : vector<2x96xf32>
    %cst_26 = arith.constant 1.000000e+00 : f32
    %117 = vector.broadcast %cst_26 : f32 to vector<2x96xf32>
    %118 = arith.addf %117, %116 : vector<2x96xf32>
    %119 = arith.divf %117, %118 : vector<2x96xf32>
    %120 = vector.extract_strided_slice %113 {offsets = [0, 96], sizes = [2, 32], strides = [1, 1]} : vector<2x128xf32> to vector<2x32xf32>
    %121 = math.tanh %120 : vector<2x32xf32>
    %122 = vector.extract_strided_slice %119 {offsets = [0, 32], sizes = [2, 32], strides = [1, 1]} : vector<2x96xf32> to vector<2x32xf32>
    %123 = arith.mulf %122, %107 : vector<2x32xf32>
    %124 = vector.extract_strided_slice %119 {offsets = [0, 0], sizes = [2, 32], strides = [1, 1]} : vector<2x96xf32> to vector<2x32xf32>
    %125 = arith.mulf %124, %121 : vector<2x32xf32>
    %126 = arith.addf %123, %125 : vector<2x32xf32>
    %127 = vector.extract_strided_slice %119 {offsets = [0, 64], sizes = [2, 32], strides = [1, 1]} : vector<2x96xf32> to vector<2x32xf32>
    %128 = math.tanh %126 : vector<2x32xf32>
    %129 = arith.mulf %127, %128 : vector<2x32xf32>
    %130 = vector.extract_strided_slice %31 {offsets = [10, 0], sizes = [2, 128], strides = [1, 1]} : vector<16x128xf32> to vector<2x128xf32>
    %cst_27 = arith.constant dense<0.000000e+00> : vector<2x128xf32>
    %131 = tpu.matmul %129, %32, %cst_27 {dimension_numbers = #tpu.dot_dimension_numbers<[1], [0], [0], [1], [0, 0, 1, 1], [], []>} : vector<2x32xf32>, vector<32x128xf32>, vector<2x128xf32> -> vector<2x128xf32>
    %132 = arith.addf %130, %131 : vector<2x128xf32>
    %133 = vector.extract_strided_slice %132 {offsets = [0, 0], sizes = [2, 96], strides = [1, 1]} : vector<2x128xf32> to vector<2x96xf32>
    %134 = arith.negf %133 : vector<2x96xf32>
    %135 = math.exp %134 : vector<2x96xf32>
    %cst_28 = arith.constant 1.000000e+00 : f32
    %136 = vector.broadcast %cst_28 : f32 to vector<2x96xf32>
    %137 = arith.addf %136, %135 : vector<2x96xf32>
    %138 = arith.divf %136, %137 : vector<2x96xf32>
    %139 = vector.extract_strided_slice %132 {offsets = [0, 96], sizes = [2, 32], strides = [1, 1]} : vector<2x128xf32> to vector<2x32xf32>
    %140 = math.tanh %139 : vector<2x32xf32>
    %141 = vector.extract_strided_slice %138 {offsets = [0, 32], sizes = [2, 32], strides = [1, 1]} : vector<2x96xf32> to vector<2x32xf32>
    %142 = arith.mulf %141, %126 : vector<2x32xf32>
    %143 = vector.extract_strided_slice %138 {offsets = [0, 0], sizes = [2, 32], strides = [1, 1]} : vector<2x96xf32> to vector<2x32xf32>
    %144 = arith.mulf %143, %140 : vector<2x32xf32>
    %145 = arith.addf %142, %144 : vector<2x32xf32>
    %146 = vector.extract_strided_slice %138 {offsets = [0, 64], sizes = [2, 32], strides = [1, 1]} : vector<2x96xf32> to vector<2x32xf32>
    %147 = math.tanh %145 : vector<2x32xf32>
    %148 = arith.mulf %146, %147 : vector<2x32xf32>
    %149 = vector.extract_strided_slice %31 {offsets = [12, 0], sizes = [2, 128], strides = [1, 1]} : vector<16x128xf32> to vector<2x128xf32>
    %cst_29 = arith.constant dense<0.000000e+00> : vector<2x128xf32>
    %150 = tpu.matmul %148, %32, %cst_29 {dimension_numbers = #tpu.dot_dimension_numbers<[1], [0], [0], [1], [0, 0, 1, 1], [], []>} : vector<2x32xf32>, vector<32x128xf32>, vector<2x128xf32> -> vector<2x128xf32>
    %151 = arith.addf %149, %150 : vector<2x128xf32>
    %152 = vector.extract_strided_slice %151 {offsets = [0, 0], sizes = [2, 96], strides = [1, 1]} : vector<2x128xf32> to vector<2x96xf32>
    %153 = arith.negf %152 : vector<2x96xf32>
    %154 = math.exp %153 : vector<2x96xf32>
    %cst_30 = arith.constant 1.000000e+00 : f32
    %155 = vector.broadcast %cst_30 : f32 to vector<2x96xf32>
    %156 = arith.addf %155, %154 : vector<2x96xf32>
    %157 = arith.divf %155, %156 : vector<2x96xf32>
    %158 = vector.extract_strided_slice %151 {offsets = [0, 96], sizes = [2, 32], strides = [1, 1]} : vector<2x128xf32> to vector<2x32xf32>
    %159 = math.tanh %158 : vector<2x32xf32>
    %160 = vector.extract_strided_slice %157 {offsets = [0, 32], sizes = [2, 32], strides = [1, 1]} : vector<2x96xf32> to vector<2x32xf32>
    %161 = arith.mulf %160, %145 : vector<2x32xf32>
    %162 = vector.extract_strided_slice %157 {offsets = [0, 0], sizes = [2, 32], strides = [1, 1]} : vector<2x96xf32> to vector<2x32xf32>
    %163 = arith.mulf %162, %159 : vector<2x32xf32>
    %164 = arith.addf %161, %163 : vector<2x32xf32>
    %165 = vector.extract_strided_slice %157 {offsets = [0, 64], sizes = [2, 32], strides = [1, 1]} : vector<2x96xf32> to vector<2x32xf32>
    %166 = math.tanh %164 : vector<2x32xf32>
    %167 = arith.mulf %165, %166 : vector<2x32xf32>
    %168 = vector.extract_strided_slice %31 {offsets = [14, 0], sizes = [2, 128], strides = [1, 1]} : vector<16x128xf32> to vector<2x128xf32>
    %cst_31 = arith.constant dense<0.000000e+00> : vector<2x128xf32>
    %169 = tpu.matmul %167, %32, %cst_31 {dimension_numbers = #tpu.dot_dimension_numbers<[1], [0], [0], [1], [0, 0, 1, 1], [], []>} : vector<2x32xf32>, vector<32x128xf32>, vector<2x128xf32> -> vector<2x128xf32>
    %170 = arith.addf %168, %169 : vector<2x128xf32>
    %171 = vector.extract_strided_slice %170 {offsets = [0, 0], sizes = [2, 96], strides = [1, 1]} : vector<2x128xf32> to vector<2x96xf32>
    %172 = arith.negf %171 : vector<2x96xf32>
    %173 = math.exp %172 : vector<2x96xf32>
    %cst_32 = arith.constant 1.000000e+00 : f32
    %174 = vector.broadcast %cst_32 : f32 to vector<2x96xf32>
    %175 = arith.addf %174, %173 : vector<2x96xf32>
    %176 = arith.divf %174, %175 : vector<2x96xf32>
    %177 = vector.extract_strided_slice %170 {offsets = [0, 96], sizes = [2, 32], strides = [1, 1]} : vector<2x128xf32> to vector<2x32xf32>
    %178 = math.tanh %177 : vector<2x32xf32>
    %179 = vector.extract_strided_slice %176 {offsets = [0, 32], sizes = [2, 32], strides = [1, 1]} : vector<2x96xf32> to vector<2x32xf32>
    %180 = arith.mulf %179, %164 : vector<2x32xf32>
    %181 = vector.extract_strided_slice %176 {offsets = [0, 0], sizes = [2, 32], strides = [1, 1]} : vector<2x96xf32> to vector<2x32xf32>
    %182 = arith.mulf %181, %178 : vector<2x32xf32>
    %183 = arith.addf %180, %182 : vector<2x32xf32>
    %184 = vector.extract_strided_slice %176 {offsets = [0, 64], sizes = [2, 32], strides = [1, 1]} : vector<2x96xf32> to vector<2x32xf32>
    %185 = math.tanh %183 : vector<2x32xf32>
    %186 = arith.mulf %184, %185 : vector<2x32xf32>
    %187 = vector.extract_strided_slice %53 {offsets = [0, 0], sizes = [1, 32], strides = [1, 1]} : vector<2x32xf32> to vector<1x32xf32>
    %188 = vector.extract_strided_slice %72 {offsets = [0, 0], sizes = [1, 32], strides = [1, 1]} : vector<2x32xf32> to vector<1x32xf32>
    %189 = vector.extract_strided_slice %91 {offsets = [0, 0], sizes = [1, 32], strides = [1, 1]} : vector<2x32xf32> to vector<1x32xf32>
    %190 = vector.extract_strided_slice %110 {offsets = [0, 0], sizes = [1, 32], strides = [1, 1]} : vector<2x32xf32> to vector<1x32xf32>
    %191 = vector.extract_strided_slice %129 {offsets = [0, 0], sizes = [1, 32], strides = [1, 1]} : vector<2x32xf32> to vector<1x32xf32>
    %192 = vector.extract_strided_slice %148 {offsets = [0, 0], sizes = [1, 32], strides = [1, 1]} : vector<2x32xf32> to vector<1x32xf32>
    %193 = vector.extract_strided_slice %167 {offsets = [0, 0], sizes = [1, 32], strides = [1, 1]} : vector<2x32xf32> to vector<1x32xf32>
    %194 = vector.extract_strided_slice %186 {offsets = [0, 0], sizes = [1, 32], strides = [1, 1]} : vector<2x32xf32> to vector<1x32xf32>
    %195 = vector.extract_strided_slice %53 {offsets = [1, 0], sizes = [1, 32], strides = [1, 1]} : vector<2x32xf32> to vector<1x32xf32>
    %196 = vector.extract_strided_slice %72 {offsets = [1, 0], sizes = [1, 32], strides = [1, 1]} : vector<2x32xf32> to vector<1x32xf32>
    %197 = vector.extract_strided_slice %91 {offsets = [1, 0], sizes = [1, 32], strides = [1, 1]} : vector<2x32xf32> to vector<1x32xf32>
    %198 = vector.extract_strided_slice %110 {offsets = [1, 0], sizes = [1, 32], strides = [1, 1]} : vector<2x32xf32> to vector<1x32xf32>
    %199 = vector.extract_strided_slice %129 {offsets = [1, 0], sizes = [1, 32], strides = [1, 1]} : vector<2x32xf32> to vector<1x32xf32>
    %200 = vector.extract_strided_slice %148 {offsets = [1, 0], sizes = [1, 32], strides = [1, 1]} : vector<2x32xf32> to vector<1x32xf32>
    %201 = vector.extract_strided_slice %167 {offsets = [1, 0], sizes = [1, 32], strides = [1, 1]} : vector<2x32xf32> to vector<1x32xf32>
    %202 = vector.extract_strided_slice %186 {offsets = [1, 0], sizes = [1, 32], strides = [1, 1]} : vector<2x32xf32> to vector<1x32xf32>
    %203 = tpu.concatenate %187, %188, %189, %190, %191, %192, %193, %194, %195, %196, %197, %198, %199, %200, %201, %202 in 0 : vector<1x32xf32>, vector<1x32xf32>, vector<1x32xf32>, vector<1x32xf32>, vector<1x32xf32>, vector<1x32xf32>, vector<1x32xf32>, vector<1x32xf32>, vector<1x32xf32>, vector<1x32xf32>, vector<1x32xf32>, vector<1x32xf32>, vector<1x32xf32>, vector<1x32xf32>, vector<1x32xf32>, vector<1x32xf32> -> vector<16x32xf32>
    %c0_33 = arith.constant 0 : index
    %c0_34 = arith.constant 0 : index
    %204 = vector.load %arg9[%c0_33, %c0_34] : memref<1x32xf32, #tpu.memory_space<vmem>>, vector<1x32xf32>
    %c0_35 = arith.constant 0 : index
    %c0_36 = arith.constant 0 : index
    %205 = vector.load %arg10[%c0_35, %c0_36] : memref<1x32xf32, #tpu.memory_space<vmem>>, vector<1x32xf32>
    %206 = arith.addf %203, %9 : vector<16x32xf32>
    %cst_37 = arith.constant dense<0.000000e+00> : vector<16xf32>
    %207 = vector.multi_reduction <add>, %206, %cst_37 [1] : vector<16x32xf32> to vector<16xf32>
    %208 = vector.shape_cast %207 : vector<16xf32> to vector<16x1xf32>
    %cst_38 = arith.constant 3.200000e+01 : f32
    %209 = vector.broadcast %cst_38 : f32 to vector<16x1xf32>
    %210 = arith.divf %208, %209 : vector<16x1xf32>
    %211 = vector.broadcast %210 : vector<16x1xf32> to vector<16x32xf32>
    %212 = arith.subf %206, %211 : vector<16x32xf32>
    %213 = arith.mulf %212, %212 : vector<16x32xf32>
    %cst_39 = arith.constant dense<0.000000e+00> : vector<16xf32>
    %214 = vector.multi_reduction <add>, %213, %cst_39 [1] : vector<16x32xf32> to vector<16xf32>
    %215 = vector.shape_cast %214 : vector<16xf32> to vector<16x1xf32>
    %cst_40 = arith.constant 3.200000e+01 : f32
    %216 = vector.broadcast %cst_40 : f32 to vector<16x1xf32>
    %217 = arith.divf %215, %216 : vector<16x1xf32>
    %218 = vector.broadcast %210 : vector<16x1xf32> to vector<16x32xf32>
    %219 = arith.subf %206, %218 : vector<16x32xf32>
    %cst_41 = arith.constant 9.99999974E-6 : f32
    %220 = vector.broadcast %cst_41 : f32 to vector<16x1xf32>
    %221 = arith.addf %217, %220 : vector<16x1xf32>
    %222 = math.rsqrt %221 : vector<16x1xf32>
    %223 = vector.broadcast %222 : vector<16x1xf32> to vector<16x32xf32>
    %224 = arith.mulf %219, %223 : vector<16x32xf32>
    %225 = vector.broadcast %204 : vector<1x32xf32> to vector<16x32xf32>
    %226 = arith.mulf %224, %225 : vector<16x32xf32>
    %227 = vector.broadcast %205 : vector<1x32xf32> to vector<16x32xf32>
    %228 = arith.addf %226, %227 : vector<16x32xf32>
    %c0_42 = arith.constant 0 : index
    %c0_43 = arith.constant 0 : index
    %229 = vector.load %arg7[%c0_42, %c0_43] : memref<32x48xf32, #tpu.memory_space<vmem>>, vector<32x48xf32>
    %cst_44 = arith.constant dense<0.000000e+00> : vector<16x48xf32>
    %230 = tpu.matmul %228, %229, %cst_44 {dimension_numbers = #tpu.dot_dimension_numbers<[1], [0], [0], [1], [0, 0, 1, 1], [], []>} : vector<16x32xf32>, vector<32x48xf32>, vector<16x48xf32> -> vector<16x48xf32>
    %231 = vector.extract_strided_slice %230 {offsets = [0, 0], sizes = [8, 16], strides = [1, 1]} : vector<16x48xf32> to vector<8x16xf32>
    %232 = vector.extract_strided_slice %230 {offsets = [0, 16], sizes = [8, 16], strides = [1, 1]} : vector<16x48xf32> to vector<8x16xf32>
    %233 = vector.extract_strided_slice %230 {offsets = [0, 32], sizes = [8, 16], strides = [1, 1]} : vector<16x48xf32> to vector<8x16xf32>
    %234 = tpu.transpose %232, [1, 0] : vector<8x16xf32> -> vector<16x8xf32>
    %cst_45 = arith.constant dense<0.000000e+00> : vector<8x8xf32>
    %235 = tpu.matmul %231, %234, %cst_45 {dimension_numbers = #tpu.dot_dimension_numbers<[1], [0], [0], [1], [0, 0, 1, 1], [], []>} : vector<8x16xf32>, vector<16x8xf32>, vector<8x8xf32> -> vector<8x8xf32>
    %cst_46 = arith.constant 0.176776692 : f32
    %236 = vector.broadcast %cst_46 : f32 to vector<8x8xf32>
    %237 = arith.mulf %235, %236 : vector<8x8xf32>
    %cst_47 = arith.constant dense<0xFF800000> : vector<8xf32>
    %238 = vector.multi_reduction <maximumf>, %237, %cst_47 [1] : vector<8x8xf32> to vector<8xf32>
    %239 = vector.shape_cast %238 : vector<8xf32> to vector<8x1xf32>
    %240 = vector.broadcast %239 : vector<8x1xf32> to vector<8x8xf32>
    %241 = arith.subf %237, %240 : vector<8x8xf32>
    %242 = math.exp %241 : vector<8x8xf32>
    %cst_48 = arith.constant dense<0.000000e+00> : vector<8xf32>
    %243 = vector.multi_reduction <add>, %242, %cst_48 [1] : vector<8x8xf32> to vector<8xf32>
    %244 = vector.shape_cast %243 : vector<8xf32> to vector<8x1xf32>
    %245 = vector.broadcast %244 : vector<8x1xf32> to vector<8x8xf32>
    %246 = arith.divf %242, %245 : vector<8x8xf32>
    %cst_49 = arith.constant dense<0.000000e+00> : vector<8x16xf32>
    %247 = tpu.matmul %246, %233, %cst_49 {dimension_numbers = #tpu.dot_dimension_numbers<[1], [0], [0], [1], [0, 0, 1, 1], [], []>} : vector<8x8xf32>, vector<8x16xf32>, vector<8x16xf32> -> vector<8x16xf32>
    %248 = vector.extract_strided_slice %230 {offsets = [8, 0], sizes = [8, 16], strides = [1, 1]} : vector<16x48xf32> to vector<8x16xf32>
    %249 = vector.extract_strided_slice %230 {offsets = [8, 16], sizes = [8, 16], strides = [1, 1]} : vector<16x48xf32> to vector<8x16xf32>
    %250 = vector.extract_strided_slice %230 {offsets = [8, 32], sizes = [8, 16], strides = [1, 1]} : vector<16x48xf32> to vector<8x16xf32>
    %251 = tpu.transpose %249, [1, 0] : vector<8x16xf32> -> vector<16x8xf32>
    %cst_50 = arith.constant dense<0.000000e+00> : vector<8x8xf32>
    %252 = tpu.matmul %248, %251, %cst_50 {dimension_numbers = #tpu.dot_dimension_numbers<[1], [0], [0], [1], [0, 0, 1, 1], [], []>} : vector<8x16xf32>, vector<16x8xf32>, vector<8x8xf32> -> vector<8x8xf32>
    %cst_51 = arith.constant 0.176776692 : f32
    %253 = vector.broadcast %cst_51 : f32 to vector<8x8xf32>
    %254 = arith.mulf %252, %253 : vector<8x8xf32>
    %cst_52 = arith.constant dense<0xFF800000> : vector<8xf32>
    %255 = vector.multi_reduction <maximumf>, %254, %cst_52 [1] : vector<8x8xf32> to vector<8xf32>
    %256 = vector.shape_cast %255 : vector<8xf32> to vector<8x1xf32>
    %257 = vector.broadcast %256 : vector<8x1xf32> to vector<8x8xf32>
    %258 = arith.subf %254, %257 : vector<8x8xf32>
    %259 = math.exp %258 : vector<8x8xf32>
    %cst_53 = arith.constant dense<0.000000e+00> : vector<8xf32>
    %260 = vector.multi_reduction <add>, %259, %cst_53 [1] : vector<8x8xf32> to vector<8xf32>
    %261 = vector.shape_cast %260 : vector<8xf32> to vector<8x1xf32>
    %262 = vector.broadcast %261 : vector<8x1xf32> to vector<8x8xf32>
    %263 = arith.divf %259, %262 : vector<8x8xf32>
    %cst_54 = arith.constant dense<0.000000e+00> : vector<8x16xf32>
    %264 = tpu.matmul %263, %250, %cst_54 {dimension_numbers = #tpu.dot_dimension_numbers<[1], [0], [0], [1], [0, 0, 1, 1], [], []>} : vector<8x8xf32>, vector<8x16xf32>, vector<8x16xf32> -> vector<8x16xf32>
    %265 = tpu.concatenate %247, %264 in 0 : vector<8x16xf32>, vector<8x16xf32> -> vector<16x16xf32>
    %c0_55 = arith.constant 0 : index
    %c0_56 = arith.constant 0 : index
    %266 = vector.load %arg8[%c0_55, %c0_56] : memref<16x32xf32, #tpu.memory_space<vmem>>, vector<16x32xf32>
    %cst_57 = arith.constant dense<0.000000e+00> : vector<16x32xf32>
    %267 = tpu.matmul %265, %266, %cst_57 {dimension_numbers = #tpu.dot_dimension_numbers<[1], [0], [0], [1], [0, 0, 1, 1], [], []>} : vector<16x16xf32>, vector<16x32xf32>, vector<16x32xf32> -> vector<16x32xf32>
    %268 = arith.addf %267, %228 : vector<16x32xf32>
    %cst_58 = arith.constant dense<0.000000e+00> : vector<16xf32>
    %269 = vector.multi_reduction <add>, %268, %cst_58 [1] : vector<16x32xf32> to vector<16xf32>
    %270 = vector.shape_cast %269 : vector<16xf32> to vector<16x1xf32>
    %cst_59 = arith.constant 3.200000e+01 : f32
    %271 = vector.broadcast %cst_59 : f32 to vector<16x1xf32>
    %272 = arith.divf %270, %271 : vector<16x1xf32>
    %273 = vector.broadcast %272 : vector<16x1xf32> to vector<16x32xf32>
    %274 = arith.subf %268, %273 : vector<16x32xf32>
    %275 = arith.mulf %274, %274 : vector<16x32xf32>
    %cst_60 = arith.constant dense<0.000000e+00> : vector<16xf32>
    %276 = vector.multi_reduction <add>, %275, %cst_60 [1] : vector<16x32xf32> to vector<16xf32>
    %277 = vector.shape_cast %276 : vector<16xf32> to vector<16x1xf32>
    %cst_61 = arith.constant 3.200000e+01 : f32
    %278 = vector.broadcast %cst_61 : f32 to vector<16x1xf32>
    %279 = arith.divf %277, %278 : vector<16x1xf32>
    %280 = vector.broadcast %272 : vector<16x1xf32> to vector<16x32xf32>
    %281 = arith.subf %268, %280 : vector<16x32xf32>
    %cst_62 = arith.constant 9.99999974E-6 : f32
    %282 = vector.broadcast %cst_62 : f32 to vector<16x1xf32>
    %283 = arith.addf %279, %282 : vector<16x1xf32>
    %284 = math.rsqrt %283 : vector<16x1xf32>
    %285 = vector.broadcast %284 : vector<16x1xf32> to vector<16x32xf32>
    %286 = arith.mulf %281, %285 : vector<16x32xf32>
    %287 = vector.broadcast %204 : vector<1x32xf32> to vector<16x32xf32>
    %288 = arith.mulf %286, %287 : vector<16x32xf32>
    %289 = vector.broadcast %205 : vector<1x32xf32> to vector<16x32xf32>
    %290 = arith.addf %288, %289 : vector<16x32xf32>
    %291 = vector.extract_strided_slice %290 {offsets = [0, 0], sizes = [8, 32], strides = [1, 1]} : vector<16x32xf32> to vector<8x32xf32>
    %cst_63 = arith.constant dense<0.000000e+00> : vector<32xf32>
    %292 = vector.multi_reduction <add>, %291, %cst_63 [0] : vector<8x32xf32> to vector<32xf32>
    %293 = vector.shape_cast %292 : vector<32xf32> to vector<1x32xf32>
    %cst_64 = arith.constant 8.000000e+00 : f32
    %294 = vector.broadcast %cst_64 : f32 to vector<1x32xf32>
    %295 = arith.divf %293, %294 : vector<1x32xf32>
    %296 = vector.extract_strided_slice %290 {offsets = [8, 0], sizes = [8, 32], strides = [1, 1]} : vector<16x32xf32> to vector<8x32xf32>
    %cst_65 = arith.constant dense<0.000000e+00> : vector<32xf32>
    %297 = vector.multi_reduction <add>, %296, %cst_65 [0] : vector<8x32xf32> to vector<32xf32>
    %298 = vector.shape_cast %297 : vector<32xf32> to vector<1x32xf32>
    %cst_66 = arith.constant 8.000000e+00 : f32
    %299 = vector.broadcast %cst_66 : f32 to vector<1x32xf32>
    %300 = arith.divf %298, %299 : vector<1x32xf32>
    %301 = tpu.concatenate %295, %300 in 0 : vector<1x32xf32>, vector<1x32xf32> -> vector<2x32xf32>
    %c0_67 = arith.constant 0 : index
    %c0_68 = arith.constant 0 : index
    %302 = vector.load %arg11[%c0_67, %c0_68] : memref<2x32xf32, #tpu.memory_space<vmem>>, vector<2x32xf32>
    tpu.vector_store %arg11[%c0_67, %c0_68], %301 {strides = array<i32>} : memref<2x32xf32, #tpu.memory_space<vmem>>, vector<2x32xf32>,
    return
  }
  func.func @transform_0(%arg0: i32) -> (i32, i32, i32) {
    %c0_i32 = arith.constant 0 : i32
    %c0_i32_0 = arith.constant 0 : i32
    %c0_i32_1 = arith.constant 0 : i32
    %c0_i32_2 = arith.constant 0 : i32
    return %c0_i32, %c0_i32_0, %c0_i32_1 : i32, i32, i32
  }
  func.func @transform_1(%arg0: i32) -> (i32, i32) {
    %c0_i32 = arith.constant 0 : i32
    %c0_i32_0 = arith.constant 0 : i32
    %c0_i32_1 = arith.constant 0 : i32
    return %c0_i32, %c0_i32_0 : i32, i32
  }
  func.func @transform_2(%arg0: i32) -> (i32, i32) {
    %c0_i32 = arith.constant 0 : i32
    %c0_i32_0 = arith.constant 0 : i32
    %c0_i32_1 = arith.constant 0 : i32
    return %c0_i32, %c0_i32_0 : i32, i32
  }
  func.func @transform_3(%arg0: i32) -> (i32, i32) {
    %c0_i32 = arith.constant 0 : i32
    %c0_i32_0 = arith.constant 0 : i32
    %c0_i32_1 = arith.constant 0 : i32
    return %c0_i32, %c0_i32_0 : i32, i32
  }
  func.func @transform_4(%arg0: i32) -> (i32, i32) {
    %c0_i32 = arith.constant 0 : i32
    %c0_i32_0 = arith.constant 0 : i32
    %c0_i32_1 = arith.constant 0 : i32
    return %c0_i32, %c0_i32_0 : i32, i32
  }
  func.func @transform_5(%arg0: i32) -> (i32, i32) {
    %c0_i32 = arith.constant 0 : i32
    %c0_i32_0 = arith.constant 0 : i32
    %c0_i32_1 = arith.constant 0 : i32
    return %c0_i32, %c0_i32_0 : i32, i32
  }
  func.func @transform_6(%arg0: i32) -> (i32, i32) {
    %c0_i32 = arith.constant 0 : i32
    %c0_i32_0 = arith.constant 0 : i32
    %c0_i32_1 = arith.constant 0 : i32
    return %c0_i32, %c0_i32_0 : i32, i32
  }
  func.func @transform_7(%arg0: i32) -> (i32, i32) {
    %c0_i32 = arith.constant 0 : i32
    %c0_i32_0 = arith.constant 0 : i32
    %c0_i32_1 = arith.constant 0 : i32
    return %c0_i32, %c0_i32_0 : i32, i32
  }
  func.func @transform_8(%arg0: i32) -> (i32, i32) {
    %c0_i32 = arith.constant 0 : i32
    %c0_i32_0 = arith.constant 0 : i32
    %c0_i32_1 = arith.constant 0 : i32
    return %c0_i32, %c0_i32_0 : i32, i32
  }
  func.func @transform_9(%arg0: i32) -> (i32, i32) {
    %c0_i32 = arith.constant 0 : i32
    %c0_i32_0 = arith.constant 0 : i32
    %c0_i32_1 = arith.constant 0 : i32
    return %c0_i32, %c0_i32_0 : i32, i32
  }
  func.func @transform_10(%arg0: i32) -> (i32, i32) {
    %c0_i32 = arith.constant 0 : i32
    %c0_i32_0 = arith.constant 0 : i32
    %c0_i32_1 = arith.constant 0 : i32
    return %c0_i32, %c0_i32_0 : i32, i32
  }
}

</mosaic_0001>

<llo_original>
// kernel: res_attn_lstm_forward.1
$region0: #{res_attn_lstm_forward.1}
  #allocation0 [shape = 'u32[]', space=smem, size = 0x4, offset = 0x4, fixed_abs, tag = 'smem constant byte address 0x4 - core index']
  #allocation1 [shape = 'u32[144,128]{1,0:T(1,128)}', space=vmem, size = 0x12000, scoped, tag = 'internal scratch']
  %s0 = inlined_call_operand.vmem [shape: f32[2,8,16], index: 0, kind: input, shape index: {}]
  %s1 = inlined_call_operand.vmem [shape: f32[32,128], index: 1, kind: input, shape index: {}]
  %s2 = inlined_call_operand.vmem [shape: f32[32,128], index: 2, kind: input, shape index: {}]
  %s3 = inlined_call_operand.vmem [shape: f32[1,128], index: 3, kind: input, shape index: {}]
  %s4 = inlined_call_operand.vmem [shape: f32[16,32], index: 4, kind: input, shape index: {}]
  %s5 = inlined_call_operand.vmem [shape: f32[1,32], index: 5, kind: input, shape index: {}]
  %s6 = inlined_call_operand.vmem [shape: f32[32,48], index: 6, kind: input, shape index: {}]
  %s7 = inlined_call_operand.vmem [shape: f32[16,32], index: 7, kind: input, shape index: {}]
  %s8 = inlined_call_operand.vmem [shape: f32[1,32], index: 8, kind: input, shape index: {}]
  %s9 = inlined_call_operand.vmem [shape: f32[1,32], index: 9, kind: input, shape index: {}]
  %s10 = inlined_call_operand.hbm [shape: f32[2,32], index: 10, kind: output, shape index: {}]
  %s11 = sld [smem:[#allocation0]]
  $region50: #{res_attn_lstm_forward.1} parent=0
    _
  %s13 = ssub.s32 1, %s11
  %s14 = scalar_select 0, %s13, %s11
  $region1: #{res_attn_lstm_forward.1} parent=0
    #allocation2 [shape = 'u8[1024]{0}', space=vmem, size = 0x400, scoped, tag = 'output window, operand 0, single buffered']
    #allocation3 [shape = 's32[1]{0}', space=sflag, size = 0x4, scoped, tag = 'scoped memory for res_attn_lstm_forward.1']
    %15 = vsyncpa [#allocation3], 0
    // Predicated region
    $region2: #{res_attn_lstm_forward.1} parent=1 // pred_check
      _
    $region3: #{res_attn_lstm_forward.1} parent=1 // pred_check_branch
      %17 = sbr.rel (0) target = $region5
    $region4: #{res_attn_lstm_forward.1} parent=1 // pred_region
      _
    $region5: #{res_attn_lstm_forward.1} parent=1 // pred_fallthru
      _
    // Predicated region
    $region6: #{res_attn_lstm_forward.1} parent=1 // pred_check
      _
    $region7: #{res_attn_lstm_forward.1} parent=1 // pred_check_branch
      %19 = sbr.rel (0) target = $region9
    $region8: #{res_attn_lstm_forward.1} parent=1 // pred_region
      _
    $region9: #{res_attn_lstm_forward.1} parent=1 // pred_fallthru
      _
    // Predicated region
    $region10: #{res_attn_lstm_forward.1} parent=1 // pred_check
      _
    $region11: #{res_attn_lstm_forward.1} parent=1 // pred_check_branch
      %21 = sbr.rel (0) target = $region13
    $region12: #{res_attn_lstm_forward.1} parent=1 // pred_region
      _
    $region13: #{res_attn_lstm_forward.1} parent=1 // pred_fallthru
      _
    // Predicated region
    $region14: #{res_attn_lstm_forward.1} parent=1 // pred_check
      _
    $region15: #{res_attn_lstm_forward.1} parent=1 // pred_check_branch
      %23 = sbr.rel (0) target = $region17
    $region16: #{res_attn_lstm_forward.1} parent=1 // pred_region
      _
    $region17: #{res_attn_lstm_forward.1} parent=1 // pred_fallthru
      _
    // Predicated region
    $region18: #{res_attn_lstm_forward.1} parent=1 // pred_check
      _
    $region19: #{res_attn_lstm_forward.1} parent=1 // pred_check_branch
      %25 = sbr.rel (0) target = $region21
    $region20: #{res_attn_lstm_forward.1} parent=1 // pred_region
      _
    $region21: #{res_attn_lstm_forward.1} parent=1 // pred_fallthru
      _
    // Predicated region
    $region22: #{res_attn_lstm_forward.1} parent=1 // pred_check
      _
    $region23: #{res_attn_lstm_forward.1} parent=1 // pred_check_branch
      %27 = sbr.rel (0) target = $region25
    $region24: #{res_attn_lstm_forward.1} parent=1 // pred_region
      _
    $region25: #{res_attn_lstm_forward.1} parent=1 // pred_fallthru
      _
    // Predicated region
    $region26: #{res_attn_lstm_forward.1} parent=1 // pred_check
      _
    $region27: #{res_attn_lstm_forward.1} parent=1 // pred_check_branch
      %29 = sbr.rel (0) target = $region29
    $region28: #{res_attn_lstm_forward.1} parent=1 // pred_region
      _
    $region29: #{res_attn_lstm_forward.1} parent=1 // pred_fallthru
      _
    // Predicated region
    $region30: #{res_attn_lstm_forward.1} parent=1 // pred_check
      _
    $region31: #{res_attn_lstm_forward.1} parent=1 // pred_check_branch
      %31 = sbr.rel (0) target = $region33
    $region32: #{res_attn_lstm_forward.1} parent=1 // pred_region
      _
    $region33: #{res_attn_lstm_forward.1} parent=1 // pred_fallthru
      _
    // Predicated region
    $region34: #{res_attn_lstm_forward.1} parent=1 // pred_check
      _
    $region35: #{res_attn_lstm_forward.1} parent=1 // pred_check_branch
      %33 = sbr.rel (0) target = $region37
    $region36: #{res_attn_lstm_forward.1} parent=1 // pred_region
      _
    $region37: #{res_attn_lstm_forward.1} parent=1 // pred_fallthru
      _
    // Predicated region
    $region38: #{res_attn_lstm_forward.1} parent=1 // pred_check
      _
    $region39: #{res_attn_lstm_forward.1} parent=1 // pred_check_branch
      %35 = sbr.rel (0) target = $region41
    $region40: #{res_attn_lstm_forward.1} parent=1 // pred_region
      _
    $region41: #{res_attn_lstm_forward.1} parent=1 // pred_fallthru
      _
    %v36 = vld [vmem:[%s0] sm:$0xff]
    %s37 = scalar_lea.vmem %s0, 8
    %v38 = vld [vmem:[%s37] sm:$0xff]
    %v39 = vld [vmem:[%s4] sm:$0xff]
    %v40 = vld [vmem:[%s4 + $0x8] sm:$0xff]
    %v41 = vld [vmem:[%s5] sm:$0x1]
    %v43 = vlaneseq
    %v44 = vshrl.u32 %v43, 7
    %v45 = vsub.s32 0, %v44
    %v46 = vrot.slane %v41, %v45
    %vm48 = vcmask 130048
    %v50 = vsel %vm48, %v36, 0
    %v53 = vsel %vm48, %v38, 0
    %55 = vmatprep.subr.mxu0 0.0
    %56 = vmatpush1.msra.mxu0 %v39
    %57 = vmatprep.subr.mxu0 0.0
    %58 = vmatpush1.msra.mxu0 %v40
    %59 = vmatprep.subr.mxu0 0.0
    %60 = vmatpush1.msra.mxu0 0.0
    %61 = vmatprep.subr.mxu0 0.0
    %62 = vmatpush1.msra.mxu0 0.0
    %63 = vmatprep.subr.mxu0 0.0
    %64 = vmatpush1.msra.mxu0 0.0
    %65 = vmatprep.subr.mxu0 0.0
    %66 = vmatpush1.msra.mxu0 0.0
    %67 = vmatprep.subr.mxu0 0.0
    %68 = vmatpush1.msra.mxu0 0.0
    %69 = vmatprep.subr.mxu0 0.0
    %70 = vmatpush1.msra.mxu0 0.0
    %71 = vmatprep.subr.mxu0 0.0
    %72 = vmatpush1.msra.mxu0 0.0
    %73 = vmatprep.subr.mxu0 0.0
    %74 = vmatpush1.msra.mxu0 0.0
    %75 = vmatprep.subr.mxu0 0.0
    %76 = vmatpush1.msra.mxu0 0.0
    %77 = vmatprep.subr.mxu0 0.0
    %78 = vmatpush1.msra.mxu0 0.0
    %79 = vmatprep.subr.mxu0 0.0
    %80 = vmatpush1.msra.mxu0 0.0
    %81 = vmatprep.subr.mxu0 0.0
    %82 = vmatpush1.msra.mxu0 0.0
    %83 = vmatprep.subr.mxu0 0.0
    %84 = vmatpush1.msra.mxu0 0.0
    %85 = vmatprep.subr.mxu0 0.0
    %86 = vmatpush1.msra.mxu0 0.0
    %87 = vmatprep.subr.mxu0 0.0
    %88 = vmatpush1.msra.mxu0 0.0
    %89 = vmatprep.subr.mxu0 0.0
    %90 = vmatpush1.msra.mxu0 0.0
    %91 = vmatprep.subr.mxu0 0.0
    %92 = vmatpush1.msra.mxu0 0.0
    %93 = vmatprep.subr.mxu0 0.0
    %94 = vmatpush1.msra.mxu0 0.0
    %95 = vmatprep.subr.mxu0 0.0
    %96 = vmatpush1.msra.mxu0 0.0
    %97 = vmatprep.subr.mxu0 0.0
    %98 = vmatpush1.msra.mxu0 0.0
    %99 = vmatprep.subr.mxu0 0.0
    %100 = vmatpush1.msra.mxu0 0.0
    %101 = vmatprep.subr.mxu0 0.0
    %102 = vmatpush1.msra.mxu0 0.0
    %103 = vmatprep.subr.mxu0 0.0
    %104 = vmatpush1.msra.mxu0 0.0
    %105 = vmatprep.subr.mxu0 0.0
    %106 = vmatpush1.msra.mxu0 0.0
    %107 = vmatprep.subr.mxu0 0.0
    %108 = vmatpush1.msra.mxu0 0.0
    %109 = vmatprep.subr.mxu0 0.0
    %110 = vmatpush1.msra.mxu0 0.0
    %111 = vmatprep.subr.mxu0 0.0
    %112 = vmatpush1.msra.mxu0 0.0
    %113 = vmatprep.subr.mxu0 0.0
    %114 = vmatpush1.msra.mxu0 0.0
    %115 = vmatprep.subr.mxu0 0.0
    %116 = vmatpush1.msra.mxu0 0.0
    %117 = vmatprep.subr.mxu0 0.0
    %118 = vmatpush1.msra.mxu0 0.0
    %119 = vmatprep.mubr.f32.mxu0 0.0
    %120 = vmatmul.mubr.f32.gmra.mrb[0].mxu0 %v50
    %v121 = vpop.f32.mrb[0].mxu0
    %v122 = vadd.f32 %v46, %v121
    %v123 = vpop.f32.mrb[0].mxu0
    %124 = vmatprep.mubr.f32.mxu0 0.0
    %125 = vmatmul.mubr.f32.gmra.mrb[0].mxu0 %v53
    %v126 = vpop.f32.mrb[0].mxu0
    %v127 = vadd.f32 %v46, %v126
    %v128 = vpop.f32.mrb[0].mxu0
    %129 = vdwg.mxu0
    %v131 = vrot.slane %v127, 7
    %v134 = vrot.slane %v122, 7
    %v136 = vrot.slane %v127, 6
    %v138 = vrot.slane %v122, 6
    %v140 = vrot.slane %v127, 5
    %v142 = vrot.slane %v122, 5
    %v144 = vrot.slane %v127, 4
    %v146 = vrot.slane %v122, 4
    %v148 = vrot.slane %v127, 3
    %v150 = vrot.slane %v122, 3
    %v152 = vrot.slane %v127, 2
    %v154 = vrot.slane %v122, 2
    %v156 = vrot.slane %v127, 1
    %v158 = vrot.slane %v122, 1
    %vm160 = vcmask 1040384
    %v161 = vsel %vm160, %v122, %v131
    %vm162 = vcmask 1041408
    %v163 = vsel %vm162, %v161, %v134
    %vm164 = vcmask 1042432
    %v165 = vsel %vm164, %v163, %v136
    %vm166 = vcmask 1043456
    %v167 = vsel %vm166, %v165, %v138
    %vm168 = vcmask 1044480
    %v169 = vsel %vm168, %v167, %v140
    %vm170 = vcmask 1045504
    %v171 = vsel %vm170, %v169, %v142
    %vm172 = vcmask 1046528
    %v173 = vsel %vm172, %v171, %v144
    %v174 = vsel %vm160, %v146, %v148
    %v175 = vsel %vm162, %v174, %v150
    %v176 = vsel %vm164, %v175, %v152
    %v177 = vsel %vm166, %v176, %v154
    %v178 = vsel %vm168, %v177, %v156
    %v179 = vsel %vm170, %v178, %v158
    %v180 = vsel %vm172, %v179, %v127
    %v181 = vld [vmem:[%s1] sm:$0xff]
    %v182 = vld [vmem:[%s1 + $0x8] sm:$0xff]
    %v183 = vld [vmem:[%s1 + $0x10] sm:$0xff]
    %v184 = vld [vmem:[%s1 + $0x18] sm:$0xff]
    %v185 = vld [vmem:[%s3] sm:$0x1]
    %v187 = vlaneseq
    %v188 = vshrl.u32 %v187, 7
    %v189 = vsub.s32 0, %v188
    %v190 = vrot.slane %v185, %v189
    %vm192 = vcmask 261120
    %v194 = vsel %vm192, %v173, 0
    %v197 = vsel %vm192, %v180, 0
    %199 = vmatprep.subr.mxu0 0.0
    %200 = vmatpush1.msra.mxu0 %v181
    %201 = vmatprep.subr.mxu0 0.0
    %202 = vmatpush1.msra.mxu0 %v182
    %203 = vmatprep.subr.mxu0 0.0
    %204 = vmatpush1.msra.mxu0 %v183
    %205 = vmatprep.subr.mxu0 0.0
    %206 = vmatpush1.msra.mxu0 %v184
    %207 = vmatprep.subr.mxu0 0.0
    %208 = vmatpush1.msra.mxu0 0.0
    %209 = vmatprep.subr.mxu0 0.0
    %210 = vmatpush1.msra.mxu0 0.0
    %211 = vmatprep.subr.mxu0 0.0
    %212 = vmatpush1.msra.mxu0 0.0
    %213 = vmatprep.subr.mxu0 0.0
    %214 = vmatpush1.msra.mxu0 0.0
    %215 = vmatprep.subr.mxu0 0.0
    %216 = vmatpush1.msra.mxu0 0.0
    %217 = vmatprep.subr.mxu0 0.0
    %218 = vmatpush1.msra.mxu0 0.0
    %219 = vmatprep.subr.mxu0 0.0
    %220 = vmatpush1.msra.mxu0 0.0
    %221 = vmatprep.subr.mxu0 0.0
    %222 = vmatpush1.msra.mxu0 0.0
    %223 = vmatprep.subr.mxu0 0.0
    %224 = vmatpush1.msra.mxu0 0.0
    %225 = vmatprep.subr.mxu0 0.0
    %226 = vmatpush1.msra.mxu0 0.0
    %227 = vmatprep.subr.mxu0 0.0
    %228 = vmatpush1.msra.mxu0 0.0
    %229 = vmatprep.subr.mxu0 0.0
    %230 = vmatpush1.msra.mxu0 0.0
    %231 = vmatprep.subr.mxu0 0.0
    %232 = vmatpush1.msra.mxu0 0.0
    %233 = vmatprep.subr.mxu0 0.0
    %234 = vmatpush1.msra.mxu0 0.0
    %235 = vmatprep.subr.mxu0 0.0
    %236 = vmatpush1.msra.mxu0 0.0
    %237 = vmatprep.subr.mxu0 0.0
    %238 = vmatpush1.msra.mxu0 0.0
    %239 = vmatprep.subr.mxu0 0.0
    %240 = vmatpush1.msra.mxu0 0.0
    %241 = vmatprep.subr.mxu0 0.0
    %242 = vmatpush1.msra.mxu0 0.0
    %243 = vmatprep.subr.mxu0 0.0
    %244 = vmatpush1.msra.mxu0 0.0
    %245 = vmatprep.subr.mxu0 0.0
    %246 = vmatpush1.msra.mxu0 0.0
    %247 = vmatprep.subr.mxu0 0.0
    %248 = vmatpush1.msra.mxu0 0.0
    %249 = vmatprep.subr.mxu0 0.0
    %250 = vmatpush1.msra.mxu0 0.0
    %251 = vmatprep.subr.mxu0 0.0
    %252 = vmatpush1.msra.mxu0 0.0
    %253 = vmatprep.subr.mxu0 0.0
    %254 = vmatpush1.msra.mxu0 0.0
    %255 = vmatprep.subr.mxu0 0.0
    %256 = vmatpush1.msra.mxu0 0.0
    %257 = vmatprep.subr.mxu0 0.0
    %258 = vmatpush1.msra.mxu0 0.0
    %259 = vmatprep.subr.mxu0 0.0
    %260 = vmatpush1.msra.mxu0 0.0
    %261 = vmatprep.subr.mxu0 0.0
    %262 = vmatpush1.msra.mxu0 0.0
    %263 = vmatprep.mubr.f32.mxu0 0.0
    %264 = vmatmul.mubr.f32.gmra.mrb[0].mxu0 %v194
    %v265 = vpop.f32.mrb[0].mxu0
    %v266 = vadd.f32 %v190, %v265
    %v267 = vpop.f32.mrb[0].mxu0
    %268 = vmatprep.mubr.f32.mxu0 0.0
    %269 = vmatmul.mubr.f32.gmra.mrb[0].mxu0 %v197
    %v270 = vpop.f32.mrb[0].mxu0
    %v271 = vadd.f32 %v190, %v270
    %v272 = vpop.f32.mrb[0].mxu0
    %273 = vdwg.mxu0
    %v274 = vld [vmem:[%s2] sm:$0xff]
    %v275 = vld [vmem:[%s2 + $0x8] sm:$0xff]
    %v276 = vld [vmem:[%s2 + $0x10] sm:$0xff]
    %v277 = vld [vmem:[%s2 + $0x18] sm:$0xff]
    %v279 = vsel %vm192, 0.0, 0
    %281 = vmatprep.subr.mxu0 0.0
    %282 = vmatpush1.msra.mxu0 %v274
    %283 = vmatprep.subr.mxu0 0.0
    %284 = vmatpush1.msra.mxu0 %v275
    %285 = vmatprep.subr.mxu0 0.0
    %286 = vmatpush1.msra.mxu0 %v276
    %287 = vmatprep.subr.mxu0 0.0
    %288 = vmatpush1.msra.mxu0 %v277
    %289 = vmatprep.subr.mxu0 0.0
    %290 = vmatpush1.msra.mxu0 0.0
    %291 = vmatprep.subr.mxu0 0.0
    %292 = vmatpush1.msra.mxu0 0.0
    %293 = vmatprep.subr.mxu0 0.0
    %294 = vmatpush1.msra.mxu0 0.0
    %295 = vmatprep.subr.mxu0 0.0
    %296 = vmatpush1.msra.mxu0 0.0
    %297 = vmatprep.subr.mxu0 0.0
    %298 = vmatpush1.msra.mxu0 0.0
    %299 = vmatprep.subr.mxu0 0.0
    %300 = vmatpush1.msra.mxu0 0.0
    %301 = vmatprep.subr.mxu0 0.0
    %302 = vmatpush1.msra.mxu0 0.0
    %303 = vmatprep.subr.mxu0 0.0
    %304 = vmatpush1.msra.mxu0 0.0
    %305 = vmatprep.subr.mxu0 0.0
    %306 = vmatpush1.msra.mxu0 0.0
    %307 = vmatprep.subr.mxu0 0.0
    %308 = vmatpush1.msra.mxu0 0.0
    %309 = vmatprep.subr.mxu0 0.0
    %310 = vmatpush1.msra.mxu0 0.0
    %311 = vmatprep.subr.mxu0 0.0
    %312 = vmatpush1.msra.mxu0 0.0
    %313 = vmatprep.subr.mxu0 0.0
    %314 = vmatpush1.msra.mxu0 0.0
    %315 = vmatprep.subr.mxu0 0.0
    %316 = vmatpush1.msra.mxu0 0.0
    %317 = vmatprep.subr.mxu0 0.0
    %318 = vmatpush1.msra.mxu0 0.0
    %319 = vmatprep.subr.mxu0 0.0
    %320 = vmatpush1.msra.mxu0 0.0
    %321 = vmatprep.subr.mxu0 0.0
    %322 = vmatpush1.msra.mxu0 0.0
    %323 = vmatprep.subr.mxu0 0.0
    %324 = vmatpush1.msra.mxu0 0.0
    %325 = vmatprep.subr.mxu0 0.0
    %326 = vmatpush1.msra.mxu0 0.0
    %327 = vmatprep.subr.mxu0 0.0
    %328 = vmatpush1.msra.mxu0 0.0
    %329 = vmatprep.subr.mxu0 0.0
    %330 = vmatpush1.msra.mxu0 0.0
    %331 = vmatprep.subr.mxu0 0.0
    %332 = vmatpush1.msra.mxu0 0.0
    %333 = vmatprep.subr.mxu0 0.0
    %334 = vmatpush1.msra.mxu0 0.0
    %335 = vmatprep.subr.mxu0 0.0
    %336 = vmatpush1.msra.mxu0 0.0
    %337 = vmatprep.subr.mxu0 0.0
    %338 = vmatpush1.msra.mxu0 0.0
    %339 = vmatprep.subr.mxu0 0.0
    %340 = vmatpush1.msra.mxu0 0.0
    %341 = vmatprep.subr.mxu0 0.0
    %342 = vmatpush1.msra.mxu0 0.0
    %343 = vmatprep.subr.mxu0 0.0
    %344 = vmatpush1.msra.mxu0 0.0
    %345 = vmatprep.mubr.f32.mxu0 0.0
    %346 = vmatmul.mubr.f32.gmra.mrb[0].mxu0 %v279
    %v347 = vpop.f32.mrb[0].mxu0
    %v348 = vadd.f32 0.0, %v347
    %v349 = vpop.f32.mrb[0].mxu0
    %350 = vdwg.mxu0
    %v351 = vadd.f32 %v266, %v348
    %v352 = vxor.u32 %v351, 2147483648
    %v353 = vmul.f32 %v352, 1.442695
    %v354 = vpow.pop %v353
    %v355 = vadd.f32 %v354, 1.0
    %v356 = vrcp.pop %v355
    %v357 = vmul.f32 1.0, %v356
    %v358 = vtanh.pop %v351
    %v359 = vmul.f32 %v357, 0.0
    %361 = vrot.lane.b32.xlu0 %v358, 32
    %v362 = vpop.permute.xlu0 %361
    %v364 = vmul.f32 %v357, %v362
    %366 = vrot.lane.b32.xlu0 %v364, 32
    %v367 = vpop.permute.xlu0 %366
    %v369 = vadd.f32 %v359, %v367
    %v370 = vtanh.pop %v369
    %372 = vrot.lane.b32.xlu0 %v370, 32
    %v373 = vpop.permute.xlu0 %372
    %v375 = vmul.f32 %v357, %v373
    %377 = vrot.lane.b32.xlu0 %v375, 64
    %v378 = vpop.permute.xlu0 %377
    %v379 = vsel %vm192, %v378, 0
    %381 = vmatprep.subr.mxu0 0.0
    %382 = vmatpush1.msra.mxu0 %v274
    %383 = vmatprep.subr.mxu0 0.0
    %384 = vmatpush1.msra.mxu0 %v275
    %385 = vmatprep.subr.mxu0 0.0
    %386 = vmatpush1.msra.mxu0 %v276
    %387 = vmatprep.subr.mxu0 0.0
    %388 = vmatpush1.msra.mxu0 %v277
    %389 = vmatprep.subr.mxu0 0.0
    %390 = vmatpush1.msra.mxu0 0.0
    %391 = vmatprep.subr.mxu0 0.0
    %392 = vmatpush1.msra.mxu0 0.0
    %393 = vmatprep.subr.mxu0 0.0
    %394 = vmatpush1.msra.mxu0 0.0
    %395 = vmatprep.subr.mxu0 0.0
    %396 = vmatpush1.msra.mxu0 0.0
    %397 = vmatprep.subr.mxu0 0.0
    %398 = vmatpush1.msra.mxu0 0.0
    %399 = vmatprep.subr.mxu0 0.0
    %400 = vmatpush1.msra.mxu0 0.0
    %401 = vmatprep.subr.mxu0 0.0
    %402 = vmatpush1.msra.mxu0 0.0
    %403 = vmatprep.subr.mxu0 0.0
    %404 = vmatpush1.msra.mxu0 0.0
    %405 = vmatprep.subr.mxu0 0.0
    %406 = vmatpush1.msra.mxu0 0.0
    %407 = vmatprep.subr.mxu0 0.0
    %408 = vmatpush1.msra.mxu0 0.0
    %409 = vmatprep.subr.mxu0 0.0
    %410 = vmatpush1.msra.mxu0 0.0
    %411 = vmatprep.subr.mxu0 0.0
    %412 = vmatpush1.msra.mxu0 0.0
    %413 = vmatprep.subr.mxu0 0.0
    %414 = vmatpush1.msra.mxu0 0.0
    %415 = vmatprep.subr.mxu0 0.0
    %416 = vmatpush1.msra.mxu0 0.0
    %417 = vmatprep.subr.mxu0 0.0
    %418 = vmatpush1.msra.mxu0 0.0
    %419 = vmatprep.subr.mxu0 0.0
    %420 = vmatpush1.msra.mxu0 0.0
    %421 = vmatprep.subr.mxu0 0.0
    %422 = vmatpush1.msra.mxu0 0.0
    %423 = vmatprep.subr.mxu0 0.0
    %424 = vmatpush1.msra.mxu0 0.0
    %425 = vmatprep.subr.mxu0 0.0
    %426 = vmatpush1.msra.mxu0 0.0
    %427 = vmatprep.subr.mxu0 0.0
    %428 = vmatpush1.msra.mxu0 0.0
    %429 = vmatprep.subr.mxu0 0.0
    %430 = vmatpush1.msra.mxu0 0.0
    %431 = vmatprep.subr.mxu0 0.0
    %432 = vmatpush1.msra.mxu0 0.0
    %433 = vmatprep.subr.mxu0 0.0
    %434 = vmatpush1.msra.mxu0 0.0
    %435 = vmatprep.subr.mxu0 0.0
    %436 = vmatpush1.msra.mxu0 0.0
    %437 = vmatprep.subr.mxu0 0.0
    %438 = vmatpush1.msra.mxu0 0.0
    %439 = vmatprep.subr.mxu0 0.0
    %440 = vmatpush1.msra.mxu0 0.0
    %441 = vmatprep.subr.mxu0 0.0
    %442 = vmatpush1.msra.mxu0 0.0
    %443 = vmatprep.subr.mxu0 0.0
    %444 = vmatpush1.msra.mxu0 0.0
    %445 = vmatprep.mubr.f32.mxu0 0.0
    %446 = vmatmul.mubr.f32.gmra.mrb[0].mxu0 %v379
    %v447 = vpop.f32.mrb[0].mxu0
    %v448 = vadd.f32 0.0, %v447
    %v449 = vpop.f32.mrb[0].mxu0
    %450 = vdwg.mxu0
    %v452 = vrot.slane %v448, 6
    %v454 = vadd.f32 %v266, %v452
    %v455 = vxor.u32 %v454, 2147483648
    %v456 = vmul.f32 %v455, 1.442695
    %v457 = vpow.pop %v456
    %v458 = vadd.f32 %v457, 1.0
    %v459 = vrcp.pop %v458
    %v460 = vmul.f32 1.0, %v459
    %v461 = vtanh.pop %v454
    %v463 = vrot.slane %v369, 6
    %v465 = vmul.f32 %v460, %v463
    %467 = vrot.lane.b32.xlu0 %v461, 32
    %v468 = vpop.permute.xlu0 %467
    %v470 = vmul.f32 %v460, %v468
    %472 = vrot.lane.b32.xlu0 %v470, 32
    %v473 = vpop.permute.xlu0 %472
    %v475 = vadd.f32 %v465, %v473
    %v476 = vtanh.pop %v475
    %478 = vrot.lane.b32.xlu0 %v476, 32
    %v479 = vpop.permute.xlu0 %478
    %v481 = vmul.f32 %v460, %v479
    %v483 = vrot.slane %v481, 2
    %484 = vrot.lane.b32.xlu0 %v483, 64
    %v485 = vpop.permute.xlu0 %484
    %v486 = vsel %vm192, %v485, 0
    %488 = vmatprep.subr.mxu0 0.0
    %489 = vmatpush1.msra.mxu0 %v274
    %490 = vmatprep.subr.mxu0 0.0
    %491 = vmatpush1.msra.mxu0 %v275
    %492 = vmatprep.subr.mxu0 0.0
    %493 = vmatpush1.msra.mxu0 %v276
    %494 = vmatprep.subr.mxu0 0.0
    %495 = vmatpush1.msra.mxu0 %v277
    %496 = vmatprep.subr.mxu0 0.0
    %497 = vmatpush1.msra.mxu0 0.0
    %498 = vmatprep.subr.mxu0 0.0
    %499 = vmatpush1.msra.mxu0 0.0
    %500 = vmatprep.subr.mxu0 0.0
    %501 = vmatpush1.msra.mxu0 0.0
    %502 = vmatprep.subr.mxu0 0.0
    %503 = vmatpush1.msra.mxu0 0.0
    %504 = vmatprep.subr.mxu0 0.0
    %505 = vmatpush1.msra.mxu0 0.0
    %506 = vmatprep.subr.mxu0 0.0
    %507 = vmatpush1.msra.mxu0 0.0
    %508 = vmatprep.subr.mxu0 0.0
    %509 = vmatpush1.msra.mxu0 0.0
    %510 = vmatprep.subr.mxu0 0.0
    %511 = vmatpush1.msra.mxu0 0.0
    %512 = vmatprep.subr.mxu0 0.0
    %513 = vmatpush1.msra.mxu0 0.0
    %514 = vmatprep.subr.mxu0 0.0
    %515 = vmatpush1.msra.mxu0 0.0
    %516 = vmatprep.subr.mxu0 0.0
    %517 = vmatpush1.msra.mxu0 0.0
    %518 = vmatprep.subr.mxu0 0.0
    %519 = vmatpush1.msra.mxu0 0.0
    %520 = vmatprep.subr.mxu0 0.0
    %521 = vmatpush1.msra.mxu0 0.0
    %522 = vmatprep.subr.mxu0 0.0
    %523 = vmatpush1.msra.mxu0 0.0
    %524 = vmatprep.subr.mxu0 0.0
    %525 = vmatpush1.msra.mxu0 0.0
    %526 = vmatprep.subr.mxu0 0.0
    %527 = vmatpush1.msra.mxu0 0.0
    %528 = vmatprep.subr.mxu0 0.0
    %529 = vmatpush1.msra.mxu0 0.0
    %530 = vmatprep.subr.mxu0 0.0
    %531 = vmatpush1.msra.mxu0 0.0
    %532 = vmatprep.subr.mxu0 0.0
    %533 = vmatpush1.msra.mxu0 0.0
    %534 = vmatprep.subr.mxu0 0.0
    %535 = vmatpush1.msra.mxu0 0.0
    %536 = vmatprep.subr.mxu0 0.0
    %537 = vmatpush1.msra.mxu0 0.0
    %538 = vmatprep.subr.mxu0 0.0
    %539 = vmatpush1.msra.mxu0 0.0
    %540 = vmatprep.subr.mxu0 0.0
    %541 = vmatpush1.msra.mxu0 0.0
    %542 = vmatprep.subr.mxu0 0.0
    %543 = vmatpush1.msra.mxu0 0.0
    %544 = vmatprep.subr.mxu0 0.0
    %545 = vmatpush1.msra.mxu0 0.0
    %546 = vmatprep.subr.mxu0 0.0
    %547 = vmatpush1.msra.mxu0 0.0
    %548 = vmatprep.subr.mxu0 0.0
    %549 = vmatpush1.msra.mxu0 0.0
    %550 = vmatprep.subr.mxu0 0.0
    %551 = vmatpush1.msra.mxu0 0.0
    %552 = vmatprep.mubr.f32.mxu0 0.0
    %553 = vmatmul.mubr.f32.gmra.mrb[0].mxu0 %v486
    %v554 = vpop.f32.mrb[0].mxu0
    %v555 = vadd.f32 0.0, %v554
    %v556 = vpop.f32.mrb[0].mxu0
    %557 = vdwg.mxu0
    %v559 = vrot.slane %v555, 4
    %v561 = vadd.f32 %v266, %v559
    %v562 = vxor.u32 %v561, 2147483648
    %v563 = vmul.f32 %v562, 1.442695
    %v564 = vpow.pop %v563
    %v565 = vadd.f32 %v564, 1.0
    %v566 = vrcp.pop %v565
    %v567 = vmul.f32 1.0, %v566
    %v568 = vtanh.pop %v561
    %v570 = vrot.slane %v475, 6
    %v572 = vmul.f32 %v567, %v570
    %574 = vrot.lane.b32.xlu0 %v568, 32
    %v575 = vpop.permute.xlu0 %574
    %v577 = vmul.f32 %v567, %v575
    %579 = vrot.lane.b32.xlu0 %v577, 32
    %v580 = vpop.permute.xlu0 %579
    %v582 = vadd.f32 %v572, %v580
    %v583 = vtanh.pop %v582
    %585 = vrot.lane.b32.xlu0 %v583, 32
    %v586 = vpop.permute.xlu0 %585
    %v588 = vmul.f32 %v567, %v586
    %v590 = vrot.slane %v588, 4
    %591 = vrot.lane.b32.xlu0 %v590, 64
    %v592 = vpop.permute.xlu0 %591
    %v593 = vsel %vm192, %v592, 0
    %595 = vmatprep.subr.mxu0 0.0
    %596 = vmatpush1.msra.mxu0 %v274
    %597 = vmatprep.subr.mxu0 0.0
    %598 = vmatpush1.msra.mxu0 %v275
    %599 = vmatprep.subr.mxu0 0.0
    %600 = vmatpush1.msra.mxu0 %v276
    %601 = vmatprep.subr.mxu0 0.0
    %602 = vmatpush1.msra.mxu0 %v277
    %603 = vmatprep.subr.mxu0 0.0
    %604 = vmatpush1.msra.mxu0 0.0
    %605 = vmatprep.subr.mxu0 0.0
    %606 = vmatpush1.msra.mxu0 0.0
    %607 = vmatprep.subr.mxu0 0.0
    %608 = vmatpush1.msra.mxu0 0.0
    %609 = vmatprep.subr.mxu0 0.0
    %610 = vmatpush1.msra.mxu0 0.0
    %611 = vmatprep.subr.mxu0 0.0
    %612 = vmatpush1.msra.mxu0 0.0
    %613 = vmatprep.subr.mxu0 0.0
    %614 = vmatpush1.msra.mxu0 0.0
    %615 = vmatprep.subr.mxu0 0.0
    %616 = vmatpush1.msra.mxu0 0.0
    %617 = vmatprep.subr.mxu0 0.0
    %618 = vmatpush1.msra.mxu0 0.0
    %619 = vmatprep.subr.mxu0 0.0
    %620 = vmatpush1.msra.mxu0 0.0
    %621 = vmatprep.subr.mxu0 0.0
    %622 = vmatpush1.msra.mxu0 0.0
    %623 = vmatprep.subr.mxu0 0.0
    %624 = vmatpush1.msra.mxu0 0.0
    %625 = vmatprep.subr.mxu0 0.0
    %626 = vmatpush1.msra.mxu0 0.0
    %627 = vmatprep.subr.mxu0 0.0
    %628 = vmatpush1.msra.mxu0 0.0
    %629 = vmatprep.subr.mxu0 0.0
    %630 = vmatpush1.msra.mxu0 0.0
    %631 = vmatprep.subr.mxu0 0.0
    %632 = vmatpush1.msra.mxu0 0.0
    %633 = vmatprep.subr.mxu0 0.0
    %634 = vmatpush1.msra.mxu0 0.0
    %635 = vmatprep.subr.mxu0 0.0
    %636 = vmatpush1.msra.mxu0 0.0
    %637 = vmatprep.subr.mxu0 0.0
    %638 = vmatpush1.msra.mxu0 0.0
    %639 = vmatprep.subr.mxu0 0.0
    %640 = vmatpush1.msra.mxu0 0.0
    %641 = vmatprep.subr.mxu0 0.0
    %642 = vmatpush1.msra.mxu0 0.0
    %643 = vmatprep.subr.mxu0 0.0
    %644 = vmatpush1.msra.mxu0 0.0
    %645 = vmatprep.subr.mxu0 0.0
    %646 = vmatpush1.msra.mxu0 0.0
    %647 = vmatprep.subr.mxu0 0.0
    %648 = vmatpush1.msra.mxu0 0.0
    %649 = vmatprep.subr.mxu0 0.0
    %650 = vmatpush1.msra.mxu0 0.0
    %651 = vmatprep.subr.mxu0 0.0
    %652 = vmatpush1.msra.mxu0 0.0
    %653 = vmatprep.subr.mxu0 0.0
    %654 = vmatpush1.msra.mxu0 0.0
    %655 = vmatprep.subr.mxu0 0.0
    %656 = vmatpush1.msra.mxu0 0.0
    %657 = vmatprep.subr.mxu0 0.0
    %658 = vmatpush1.msra.mxu0 0.0
    %659 = vmatprep.mubr.f32.mxu0 0.0
    %660 = vmatmul.mubr.f32.gmra.mrb[0].mxu0 %v593
    %v661 = vpop.f32.mrb[0].mxu0
    %v662 = vadd.f32 0.0, %v661
    %v663 = vpop.f32.mrb[0].mxu0
    %664 = vdwg.mxu0
    %v666 = vrot.slane %v662, 2
    %v668 = vadd.f32 %v266, %v666
    %v669 = vxor.u32 %v668, 2147483648
    %v670 = vmul.f32 %v669, 1.442695
    %v671 = vpow.pop %v670
    %v672 = vadd.f32 %v671, 1.0
    %v673 = vrcp.pop %v672
    %v674 = vmul.f32 1.0, %v673
    %v675 = vtanh.pop %v668
    %v677 = vrot.slane %v582, 6
    %v679 = vmul.f32 %v674, %v677
    %681 = vrot.lane.b32.xlu0 %v675, 32
    %v682 = vpop.permute.xlu0 %681
    %v684 = vmul.f32 %v674, %v682
    %686 = vrot.lane.b32.xlu0 %v684, 32
    %v687 = vpop.permute.xlu0 %686
    %v689 = vadd.f32 %v679, %v687
    %v690 = vtanh.pop %v689
    %692 = vrot.lane.b32.xlu0 %v690, 32
    %v693 = vpop.permute.xlu0 %692
    %v695 = vmul.f32 %v674, %v693
    %v697 = vrot.slane %v695, 6
    %698 = vrot.lane.b32.xlu0 %v697, 64
    %v699 = vpop.permute.xlu0 %698
    %v700 = vsel %vm192, %v699, 0
    %702 = vmatprep.subr.mxu0 0.0
    %703 = vmatpush1.msra.mxu0 %v274
    %704 = vmatprep.subr.mxu0 0.0
    %705 = vmatpush1.msra.mxu0 %v275
    %706 = vmatprep.subr.mxu0 0.0
    %707 = vmatpush1.msra.mxu0 %v276
    %708 = vmatprep.subr.mxu0 0.0
    %709 = vmatpush1.msra.mxu0 %v277
    %710 = vmatprep.subr.mxu0 0.0
    %711 = vmatpush1.msra.mxu0 0.0
    %712 = vmatprep.subr.mxu0 0.0
    %713 = vmatpush1.msra.mxu0 0.0
    %714 = vmatprep.subr.mxu0 0.0
    %715 = vmatpush1.msra.mxu0 0.0
    %716 = vmatprep.subr.mxu0 0.0
    %717 = vmatpush1.msra.mxu0 0.0
    %718 = vmatprep.subr.mxu0 0.0
    %719 = vmatpush1.msra.mxu0 0.0
    %720 = vmatprep.subr.mxu0 0.0
    %721 = vmatpush1.msra.mxu0 0.0
    %722 = vmatprep.subr.mxu0 0.0
    %723 = vmatpush1.msra.mxu0 0.0
    %724 = vmatprep.subr.mxu0 0.0
    %725 = vmatpush1.msra.mxu0 0.0
    %726 = vmatprep.subr.mxu0 0.0
    %727 = vmatpush1.msra.mxu0 0.0
    %728 = vmatprep.subr.mxu0 0.0
    %729 = vmatpush1.msra.mxu0 0.0
    %730 = vmatprep.subr.mxu0 0.0
    %731 = vmatpush1.msra.mxu0 0.0
    %732 = vmatprep.subr.mxu0 0.0
    %733 = vmatpush1.msra.mxu0 0.0
    %734 = vmatprep.subr.mxu0 0.0
    %735 = vmatpush1.msra.mxu0 0.0
    %736 = vmatprep.subr.mxu0 0.0
    %737 = vmatpush1.msra.mxu0 0.0
    %738 = vmatprep.subr.mxu0 0.0
    %739 = vmatpush1.msra.mxu0 0.0
    %740 = vmatprep.subr.mxu0 0.0
    %741 = vmatpush1.msra.mxu0 0.0
    %742 = vmatprep.subr.mxu0 0.0
    %743 = vmatpush1.msra.mxu0 0.0
    %744 = vmatprep.subr.mxu0 0.0
    %745 = vmatpush1.msra.mxu0 0.0
    %746 = vmatprep.subr.mxu0 0.0
    %747 = vmatpush1.msra.mxu0 0.0
    %748 = vmatprep.subr.mxu0 0.0
    %749 = vmatpush1.msra.mxu0 0.0
    %750 = vmatprep.subr.mxu0 0.0
    %751 = vmatpush1.msra.mxu0 0.0
    %752 = vmatprep.subr.mxu0 0.0
    %753 = vmatpush1.msra.mxu0 0.0
    %754 = vmatprep.subr.mxu0 0.0
    %755 = vmatpush1.msra.mxu0 0.0
    %756 = vmatprep.subr.mxu0 0.0
    %757 = vmatpush1.msra.mxu0 0.0
    %758 = vmatprep.subr.mxu0 0.0
    %759 = vmatpush1.msra.mxu0 0.0
    %760 = vmatprep.subr.mxu0 0.0
    %761 = vmatpush1.msra.mxu0 0.0
    %762 = vmatprep.subr.mxu0 0.0
    %763 = vmatpush1.msra.mxu0 0.0
    %764 = vmatprep.subr.mxu0 0.0
    %765 = vmatpush1.msra.mxu0 0.0
    %766 = vmatprep.mubr.f32.mxu0 0.0
    %767 = vmatmul.mubr.f32.gmra.mrb[0].mxu0 %v700
    %v768 = vpop.f32.mrb[0].mxu0
    %v769 = vadd.f32 0.0, %v768
    %v770 = vpop.f32.mrb[0].mxu0
    %771 = vdwg.mxu0
    %v772 = vadd.f32 %v271, %v769
    %v773 = vxor.u32 %v772, 2147483648
    %v774 = vmul.f32 %v773, 1.442695
    %v775 = vpow.pop %v774
    %v776 = vadd.f32 %v775, 1.0
    %v777 = vrcp.pop %v776
    %v778 = vmul.f32 1.0, %v777
    %v779 = vtanh.pop %v772
    %v781 = vrot.slane %v689, 6
    %v783 = vmul.f32 %v778, %v781
    %785 = vrot.lane.b32.xlu0 %v779, 32
    %v786 = vpop.permute.xlu0 %785
    %v788 = vmul.f32 %v778, %v786
    %790 = vrot.lane.b32.xlu0 %v788, 32
    %v791 = vpop.permute.xlu0 %790
    %v793 = vadd.f32 %v783, %v791
    %v794 = vtanh.pop %v793
    %796 = vrot.lane.b32.xlu0 %v794, 32
    %v797 = vpop.permute.xlu0 %796
    %v799 = vmul.f32 %v778, %v797
    %801 = vrot.lane.b32.xlu0 %v799, 64
    %v802 = vpop.permute.xlu0 %801
    %v803 = vsel %vm192, %v802, 0
    %805 = vmatprep.subr.mxu0 0.0
    %806 = vmatpush1.msra.mxu0 %v274
    %807 = vmatprep.subr.mxu0 0.0
    %808 = vmatpush1.msra.mxu0 %v275
    %809 = vmatprep.subr.mxu0 0.0
    %810 = vmatpush1.msra.mxu0 %v276
    %811 = vmatprep.subr.mxu0 0.0
    %812 = vmatpush1.msra.mxu0 %v277
    %813 = vmatprep.subr.mxu0 0.0
    %814 = vmatpush1.msra.mxu0 0.0
    %815 = vmatprep.subr.mxu0 0.0
    %816 = vmatpush1.msra.mxu0 0.0
    %817 = vmatprep.subr.mxu0 0.0
    %818 = vmatpush1.msra.mxu0 0.0
    %819 = vmatprep.subr.mxu0 0.0
    %820 = vmatpush1.msra.mxu0 0.0
    %821 = vmatprep.subr.mxu0 0.0
    %822 = vmatpush1.msra.mxu0 0.0
    %823 = vmatprep.subr.mxu0 0.0
    %824 = vmatpush1.msra.mxu0 0.0
    %825 = vmatprep.subr.mxu0 0.0
    %826 = vmatpush1.msra.mxu0 0.0
    %827 = vmatprep.subr.mxu0 0.0
    %828 = vmatpush1.msra.mxu0 0.0
    %829 = vmatprep.subr.mxu0 0.0
    %830 = vmatpush1.msra.mxu0 0.0
    %831 = vmatprep.subr.mxu0 0.0
    %832 = vmatpush1.msra.mxu0 0.0
    %833 = vmatprep.subr.mxu0 0.0
    %834 = vmatpush1.msra.mxu0 0.0
    %835 = vmatprep.subr.mxu0 0.0
    %836 = vmatpush1.msra.mxu0 0.0
    %837 = vmatprep.subr.mxu0 0.0
    %838 = vmatpush1.msra.mxu0 0.0
    %839 = vmatprep.subr.mxu0 0.0
    %840 = vmatpush1.msra.mxu0 0.0
    %841 = vmatprep.subr.mxu0 0.0
    %842 = vmatpush1.msra.mxu0 0.0
    %843 = vmatprep.subr.mxu0 0.0
    %844 = vmatpush1.msra.mxu0 0.0
    %845 = vmatprep.subr.mxu0 0.0
    %846 = vmatpush1.msra.mxu0 0.0
    %847 = vmatprep.subr.mxu0 0.0
    %848 = vmatpush1.msra.mxu0 0.0
    %849 = vmatprep.subr.mxu0 0.0
    %850 = vmatpush1.msra.mxu0 0.0
    %851 = vmatprep.subr.mxu0 0.0
    %852 = vmatpush1.msra.mxu0 0.0
    %853 = vmatprep.subr.mxu0 0.0
    %854 = vmatpush1.msra.mxu0 0.0
    %855 = vmatprep.subr.mxu0 0.0
    %856 = vmatpush1.msra.mxu0 0.0
    %857 = vmatprep.subr.mxu0 0.0
    %858 = vmatpush1.msra.mxu0 0.0
    %859 = vmatprep.subr.mxu0 0.0
    %860 = vmatpush1.msra.mxu0 0.0
    %861 = vmatprep.subr.mxu0 0.0
    %862 = vmatpush1.msra.mxu0 0.0
    %863 = vmatprep.subr.mxu0 0.0
    %864 = vmatpush1.msra.mxu0 0.0
    %865 = vmatprep.subr.mxu0 0.0
    %866 = vmatpush1.msra.mxu0 0.0
    %867 = vmatprep.subr.mxu0 0.0
    %868 = vmatpush1.msra.mxu0 0.0
    %869 = vmatprep.mubr.f32.mxu0 0.0
    %870 = vmatmul.mubr.f32.gmra.mrb[0].mxu0 %v803
    %v871 = vpop.f32.mrb[0].mxu0
    %v872 = vadd.f32 0.0, %v871
    %v873 = vpop.f32.mrb[0].mxu0
    %874 = vdwg.mxu0
    %v876 = vrot.slane %v872, 6
    %v878 = vadd.f32 %v271, %v876
    %v879 = vxor.u32 %v878, 2147483648
    %v880 = vmul.f32 %v879, 1.442695
    %v881 = vpow.pop %v880
    %v882 = vadd.f32 %v881, 1.0
    %v883 = vrcp.pop %v882
    %v884 = vmul.f32 1.0, %v883
    %v885 = vtanh.pop %v878
    %v887 = vrot.slane %v793, 6
    %v889 = vmul.f32 %v884, %v887
    %891 = vrot.lane.b32.xlu0 %v885, 32
    %v892 = vpop.permute.xlu0 %891
    %v894 = vmul.f32 %v884, %v892
    %896 = vrot.lane.b32.xlu0 %v894, 32
    %v897 = vpop.permute.xlu0 %896
    %v899 = vadd.f32 %v889, %v897
    %v900 = vtanh.pop %v899
    %902 = vrot.lane.b32.xlu0 %v900, 32
    %v903 = vpop.permute.xlu0 %902
    %v905 = vmul.f32 %v884, %v903
    %v907 = vrot.slane %v905, 2
    %908 = vrot.lane.b32.xlu0 %v907, 64
    %v909 = vpop.permute.xlu0 %908
    %v910 = vsel %vm192, %v909, 0
    %912 = vmatprep.subr.mxu0 0.0
    %913 = vmatpush1.msra.mxu0 %v274
    %914 = vmatprep.subr.mxu0 0.0
    %915 = vmatpush1.msra.mxu0 %v275
    %916 = vmatprep.subr.mxu0 0.0
    %917 = vmatpush1.msra.mxu0 %v276
    %918 = vmatprep.subr.mxu0 0.0
    %919 = vmatpush1.msra.mxu0 %v277
    %920 = vmatprep.subr.mxu0 0.0
    %921 = vmatpush1.msra.mxu0 0.0
    %922 = vmatprep.subr.mxu0 0.0
    %923 = vmatpush1.msra.mxu0 0.0
    %924 = vmatprep.subr.mxu0 0.0
    %925 = vmatpush1.msra.mxu0 0.0
    %926 = vmatprep.subr.mxu0 0.0
    %927 = vmatpush1.msra.mxu0 0.0
    %928 = vmatprep.subr.mxu0 0.0
    %929 = vmatpush1.msra.mxu0 0.0
    %930 = vmatprep.subr.mxu0 0.0
    %931 = vmatpush1.msra.mxu0 0.0
    %932 = vmatprep.subr.mxu0 0.0
    %933 = vmatpush1.msra.mxu0 0.0
    %934 = vmatprep.subr.mxu0 0.0
    %935 = vmatpush1.msra.mxu0 0.0
    %936 = vmatprep.subr.mxu0 0.0
    %937 = vmatpush1.msra.mxu0 0.0
    %938 = vmatprep.subr.mxu0 0.0
    %939 = vmatpush1.msra.mxu0 0.0
    %940 = vmatprep.subr.mxu0 0.0
    %941 = vmatpush1.msra.mxu0 0.0
    %942 = vmatprep.subr.mxu0 0.0
    %943 = vmatpush1.msra.mxu0 0.0
    %944 = vmatprep.subr.mxu0 0.0
    %945 = vmatpush1.msra.mxu0 0.0
    %946 = vmatprep.subr.mxu0 0.0
    %947 = vmatpush1.msra.mxu0 0.0
    %948 = vmatprep.subr.mxu0 0.0
    %949 = vmatpush1.msra.mxu0 0.0
    %950 = vmatprep.subr.mxu0 0.0
    %951 = vmatpush1.msra.mxu0 0.0
    %952 = vmatprep.subr.mxu0 0.0
    %953 = vmatpush1.msra.mxu0 0.0
    %954 = vmatprep.subr.mxu0 0.0
    %955 = vmatpush1.msra.mxu0 0.0
    %956 = vmatprep.subr.mxu0 0.0
    %957 = vmatpush1.msra.mxu0 0.0
    %958 = vmatprep.subr.mxu0 0.0
    %959 = vmatpush1.msra.mxu0 0.0
    %960 = vmatprep.subr.mxu0 0.0
    %961 = vmatpush1.msra.mxu0 0.0
    %962 = vmatprep.subr.mxu0 0.0
    %963 = vmatpush1.msra.mxu0 0.0
    %964 = vmatprep.subr.mxu0 0.0
    %965 = vmatpush1.msra.mxu0 0.0
    %966 = vmatprep.subr.mxu0 0.0
    %967 = vmatpush1.msra.mxu0 0.0
    %968 = vmatprep.subr.mxu0 0.0
    %969 = vmatpush1.msra.mxu0 0.0
    %970 = vmatprep.subr.mxu0 0.0
    %971 = vmatpush1.msra.mxu0 0.0
    %972 = vmatprep.subr.mxu0 0.0
    %973 = vmatpush1.msra.mxu0 0.0
    %974 = vmatprep.subr.mxu0 0.0
    %975 = vmatpush1.msra.mxu0 0.0
    %976 = vmatprep.mubr.f32.mxu0 0.0
    %977 = vmatmul.mubr.f32.gmra.mrb[0].mxu0 %v910
    %v978 = vpop.f32.mrb[0].mxu0
    %v979 = vadd.f32 0.0, %v978
    %v980 = vpop.f32.mrb[0].mxu0
    %981 = vdwg.mxu0
    %v983 = vrot.slane %v979, 4
    %v985 = vadd.f32 %v271, %v983
    %v986 = vxor.u32 %v985, 2147483648
    %v987 = vmul.f32 %v986, 1.442695
    %v988 = vpow.pop %v987
    %v989 = vadd.f32 %v988, 1.0
    %v990 = vrcp.pop %v989
    %v991 = vmul.f32 1.0, %v990
    %v992 = vtanh.pop %v985
    %v994 = vrot.slane %v899, 6
    %v996 = vmul.f32 %v991, %v994
    %998 = vrot.lane.b32.xlu0 %v992, 32
    %v999 = vpop.permute.xlu0 %998
    %v1001 = vmul.f32 %v991, %v999
    %1003 = vrot.lane.b32.xlu0 %v1001, 32
    %v1004 = vpop.permute.xlu0 %1003
    %v1006 = vadd.f32 %v996, %v1004
    %v1007 = vtanh.pop %v1006
    %1009 = vrot.lane.b32.xlu0 %v1007, 32
    %v1010 = vpop.permute.xlu0 %1009
    %v1012 = vmul.f32 %v991, %v1010
    %v1014 = vrot.slane %v1012, 4
    %1015 = vrot.lane.b32.xlu0 %v1014, 64
    %v1016 = vpop.permute.xlu0 %1015
    %v1017 = vsel %vm192, %v1016, 0
    %1019 = vmatprep.subr.mxu0 0.0
    %1020 = vmatpush1.msra.mxu0 %v274
    %1021 = vmatprep.subr.mxu0 0.0
    %1022 = vmatpush1.msra.mxu0 %v275
    %1023 = vmatprep.subr.mxu0 0.0
    %1024 = vmatpush1.msra.mxu0 %v276
    %1025 = vmatprep.subr.mxu0 0.0
    %1026 = vmatpush1.msra.mxu0 %v277
    %1027 = vmatprep.subr.mxu0 0.0
    %1028 = vmatpush1.msra.mxu0 0.0
    %1029 = vmatprep.subr.mxu0 0.0
    %1030 = vmatpush1.msra.mxu0 0.0
    %1031 = vmatprep.subr.mxu0 0.0
    %1032 = vmatpush1.msra.mxu0 0.0
    %1033 = vmatprep.subr.mxu0 0.0
    %1034 = vmatpush1.msra.mxu0 0.0
    %1035 = vmatprep.subr.mxu0 0.0
    %1036 = vmatpush1.msra.mxu0 0.0
    %1037 = vmatprep.subr.mxu0 0.0
    %1038 = vmatpush1.msra.mxu0 0.0
    %1039 = vmatprep.subr.mxu0 0.0
    %1040 = vmatpush1.msra.mxu0 0.0
    %1041 = vmatprep.subr.mxu0 0.0
    %1042 = vmatpush1.msra.mxu0 0.0
    %1043 = vmatprep.subr.mxu0 0.0
    %1044 = vmatpush1.msra.mxu0 0.0
    %1045 = vmatprep.subr.mxu0 0.0
    %1046 = vmatpush1.msra.mxu0 0.0
    %1047 = vmatprep.subr.mxu0 0.0
    %1048 = vmatpush1.msra.mxu0 0.0
    %1049 = vmatprep.subr.mxu0 0.0
    %1050 = vmatpush1.msra.mxu0 0.0
    %1051 = vmatprep.subr.mxu0 0.0
    %1052 = vmatpush1.msra.mxu0 0.0
    %1053 = vmatprep.subr.mxu0 0.0
    %1054 = vmatpush1.msra.mxu0 0.0
    %1055 = vmatprep.subr.mxu0 0.0
    %1056 = vmatpush1.msra.mxu0 0.0
    %1057 = vmatprep.subr.mxu0 0.0
    %1058 = vmatpush1.msra.mxu0 0.0
    %1059 = vmatprep.subr.mxu0 0.0
    %1060 = vmatpush1.msra.mxu0 0.0
    %1061 = vmatprep.subr.mxu0 0.0
    %1062 = vmatpush1.msra.mxu0 0.0
    %1063 = vmatprep.subr.mxu0 0.0
    %1064 = vmatpush1.msra.mxu0 0.0
    %1065 = vmatprep.subr.mxu0 0.0
    %1066 = vmatpush1.msra.mxu0 0.0
    %1067 = vmatprep.subr.mxu0 0.0
    %1068 = vmatpush1.msra.mxu0 0.0
    %1069 = vmatprep.subr.mxu0 0.0
    %1070 = vmatpush1.msra.mxu0 0.0
    %1071 = vmatprep.subr.mxu0 0.0
    %1072 = vmatpush1.msra.mxu0 0.0
    %1073 = vmatprep.subr.mxu0 0.0
    %1074 = vmatpush1.msra.mxu0 0.0
    %1075 = vmatprep.subr.mxu0 0.0
    %1076 = vmatpush1.msra.mxu0 0.0
    %1077 = vmatprep.subr.mxu0 0.0
    %1078 = vmatpush1.msra.mxu0 0.0
    %1079 = vmatprep.subr.mxu0 0.0
    %1080 = vmatpush1.msra.mxu0 0.0
    %1081 = vmatprep.subr.mxu0 0.0
    %1082 = vmatpush1.msra.mxu0 0.0
    %1083 = vmatprep.mubr.f32.mxu0 0.0
    %1084 = vmatmul.mubr.f32.gmra.mrb[0].mxu0 %v1017
    %v1085 = vpop.f32.mrb[0].mxu0
    %v1086 = vadd.f32 0.0, %v1085
    %v1087 = vpop.f32.mrb[0].mxu0
    %1088 = vdwg.mxu0
    %v1090 = vrot.slane %v1086, 2
    %v1092 = vadd.f32 %v271, %v1090
    %v1093 = vxor.u32 %v1092, 2147483648
    %v1094 = vmul.f32 %v1093, 1.442695
    %v1095 = vpow.pop %v1094
    %v1096 = vadd.f32 %v1095, 1.0
    %v1097 = vrcp.pop %v1096
    %v1098 = vmul.f32 1.0, %v1097
    %v1099 = vtanh.pop %v1092
    %v1101 = vrot.slane %v1006, 6
    %v1103 = vmul.f32 %v1098, %v1101
    %1105 = vrot.lane.b32.xlu0 %v1099, 32
    %v1106 = vpop.permute.xlu0 %1105
    %v1108 = vmul.f32 %v1098, %v1106
    %1110 = vrot.lane.b32.xlu0 %v1108, 32
    %v1111 = vpop.permute.xlu0 %1110
    %v1113 = vadd.f32 %v1103, %v1111
    %v1114 = vtanh.pop %v1113
    %1116 = vrot.lane.b32.xlu0 %v1114, 32
    %v1117 = vpop.permute.xlu0 %1116
    %v1119 = vmul.f32 %v1098, %v1117
    %v1120 = vrot.slane %v481, 1
    %v1122 = vrot.slane %v588, 2
    %v1124 = vrot.slane %v695, 3
    %v1126 = vrot.slane %v799, 4
    %v1128 = vrot.slane %v905, 5
    %v1130 = vrot.slane %v1012, 6
    %v1133 = vrot.slane %v1119, 7
    %v1135 = vrot.slane %v375, 1
    %v1138 = vrot.slane %v588, 3
    %v1140 = vrot.slane %v695, 4
    %v1142 = vrot.slane %v799, 5
    %v1144 = vrot.slane %v905, 6
    %v1146 = vrot.slane %v1012, 7
    %v1148 = vsel %vm160, %v375, %v1120
    %v1149 = vsel %vm162, %v1148, %v1122
    %v1150 = vsel %vm164, %v1149, %v1124
    %v1151 = vsel %vm166, %v1150, %v1126
    %v1152 = vsel %vm168, %v1151, %v1128
    %v1153 = vsel %vm170, %v1152, %v1130
    %v1154 = vsel %vm172, %v1153, %v1133
    %v1155 = vsel %vm160, %v1135, %v483
    %v1156 = vsel %vm162, %v1155, %v1138
    %v1157 = vsel %vm164, %v1156, %v1140
    %v1158 = vsel %vm166, %v1157, %v1142
    %v1159 = vsel %vm168, %v1158, %v1144
    %v1160 = vsel %vm170, %v1159, %v1146
    %v1161 = vsel %vm172, %v1160, %v1119
    %v1162 = vld [vmem:[%s8] sm:$0x1]
    %v1163 = vld [vmem:[%s9] sm:$0x1]
    %1164 = vrot.lane.b32.xlu0 %v122, 64
    %v1165 = vpop.permute.xlu0 %1164
    %1166 = vrot.lane.b32.xlu0 %v127, 64
    %v1167 = vpop.permute.xlu0 %1166
    %v1170 = vadd.f32 %v1154, %v1165
    %v1171 = vadd.f32 %v1161, %v1167
    %1174 = vrot.lane.b32.xlu0 %v1170, 64
    %v1175 = vpop.permute.xlu0 %1174
    %1176 = vrot.lane.b32.xlu0 %v1171, 64
    %v1177 = vpop.permute.xlu0 %1176
    %v1180 = vsel %vm192, %v1175, 0.0
    %1181 = vadd.xlane.f32.xlu0 %v1180
    %v1182 = vpop.xlane.xlu0 %1181
    %v1183 = vsel %vm192, %v1177, 0.0
    %1184 = vadd.xlane.f32.xlu0 %v1183
    %v1185 = vpop.xlane.xlu0 %1184
    %v1186 = vrcp.pop 32.0
    %v1187 = vmul.f32 %v1182, %v1186
    %v1188 = vmul.f32 %v1185, %v1186
    %v1189 = vsub.f32 %v1170, %v1187
    %v1190 = vsub.f32 %v1171, %v1188
    %v1191 = vmul.f32 %v1189, %v1189
    %v1192 = vmul.f32 %v1190, %v1190
    %1195 = vrot.lane.b32.xlu0 %v1191, 64
    %v1196 = vpop.permute.xlu0 %1195
    %1197 = vrot.lane.b32.xlu0 %v1192, 64
    %v1198 = vpop.permute.xlu0 %1197
    %v1201 = vsel %vm192, %v1196, 0.0
    %1202 = vadd.xlane.f32.xlu0 %v1201
    %v1203 = vpop.xlane.xlu0 %1202
    %v1204 = vsel %vm192, %v1198, 0.0
    %1205 = vadd.xlane.f32.xlu0 %v1204
    %v1206 = vpop.xlane.xlu0 %1205
    %v1207 = vmul.f32 %v1203, %v1186
    %v1208 = vmul.f32 %v1206, %v1186
    %v1209 = vadd.f32 %v1207, 1e-05
    %v1210 = vadd.f32 %v1208, 1e-05
    %v1211 = vrsqrt.pop %v1209
    %v1212 = vrsqrt.pop %v1210
    %v1213 = vmul.f32 %v1189, %v1211
    %v1214 = vmul.f32 %v1190, %v1212
    %v1216 = vlaneseq
    %v1217 = vshrl.u32 %v1216, 7
    %v1218 = vsub.s32 0, %v1217
    %v1219 = vrot.slane %v1162, %v1218
    %1221 = vrot.lane.b32.xlu0 %v1219, 64
    %v1222 = vpop.permute.xlu0 %1221
    %v1224 = vmul.f32 %v1213, %v1222
    %v1225 = vmul.f32 %v1214, %v1222
    %v1227 = vlaneseq
    %v1228 = vshrl.u32 %v1227, 7
    %v1229 = vsub.s32 0, %v1228
    %v1230 = vrot.slane %v1163, %v1229
    %1232 = vrot.lane.b32.xlu0 %v1230, 64
    %v1233 = vpop.permute.xlu0 %1232
    %v1235 = vadd.f32 %v1224, %v1233
    %v1236 = vadd.f32 %v1225, %v1233
    %v1237 = vld [vmem:[%s6] sm:$0xff]
    %v1238 = vld [vmem:[%s6 + $0x8] sm:$0xff]
    %v1239 = vld [vmem:[%s6 + $0x10] sm:$0xff]
    %v1240 = vld [vmem:[%s6 + $0x18] sm:$0xff]
    %1243 = vrot.lane.b32.xlu0 %v1235, 64
    %v1244 = vpop.permute.xlu0 %1243
    %1245 = vrot.lane.b32.xlu0 %v1236, 64
    %v1246 = vpop.permute.xlu0 %1245
    %v1247 = vsel %vm192, %v1244, 0
    %v1249 = vsel %vm192, %v1246, 0
    %1251 = vmatprep.subr.mxu0 0.0
    %1252 = vmatpush1.msra.mxu0 %v1237
    %1253 = vmatprep.subr.mxu0 0.0
    %1254 = vmatpush1.msra.mxu0 %v1238
    %1255 = vmatprep.subr.mxu0 0.0
    %1256 = vmatpush1.msra.mxu0 %v1239
    %1257 = vmatprep.subr.mxu0 0.0
    %1258 = vmatpush1.msra.mxu0 %v1240
    %1259 = vmatprep.subr.mxu0 0.0
    %1260 = vmatpush1.msra.mxu0 0.0
    %1261 = vmatprep.subr.mxu0 0.0
    %1262 = vmatpush1.msra.mxu0 0.0
    %1263 = vmatprep.subr.mxu0 0.0
    %1264 = vmatpush1.msra.mxu0 0.0
    %1265 = vmatprep.subr.mxu0 0.0
    %1266 = vmatpush1.msra.mxu0 0.0
    %1267 = vmatprep.subr.mxu0 0.0
    %1268 = vmatpush1.msra.mxu0 0.0
    %1269 = vmatprep.subr.mxu0 0.0
    %1270 = vmatpush1.msra.mxu0 0.0
    %1271 = vmatprep.subr.mxu0 0.0
    %1272 = vmatpush1.msra.mxu0 0.0
    %1273 = vmatprep.subr.mxu0 0.0
    %1274 = vmatpush1.msra.mxu0 0.0
    %1275 = vmatprep.subr.mxu0 0.0
    %1276 = vmatpush1.msra.mxu0 0.0
    %1277 = vmatprep.subr.mxu0 0.0
    %1278 = vmatpush1.msra.mxu0 0.0
    %1279 = vmatprep.subr.mxu0 0.0
    %1280 = vmatpush1.msra.mxu0 0.0
    %1281 = vmatprep.subr.mxu0 0.0
    %1282 = vmatpush1.msra.mxu0 0.0
    %1283 = vmatprep.subr.mxu0 0.0
    %1284 = vmatpush1.msra.mxu0 0.0
    %1285 = vmatprep.subr.mxu0 0.0
    %1286 = vmatpush1.msra.mxu0 0.0
    %1287 = vmatprep.subr.mxu0 0.0
    %1288 = vmatpush1.msra.mxu0 0.0
    %1289 = vmatprep.subr.mxu0 0.0
    %1290 = vmatpush1.msra.mxu0 0.0
    %1291 = vmatprep.subr.mxu0 0.0
    %1292 = vmatpush1.msra.mxu0 0.0
    %1293 = vmatprep.subr.mxu0 0.0
    %1294 = vmatpush1.msra.mxu0 0.0
    %1295 = vmatprep.subr.mxu0 0.0
    %1296 = vmatpush1.msra.mxu0 0.0
    %1297 = vmatprep.subr.mxu0 0.0
    %1298 = vmatpush1.msra.mxu0 0.0
    %1299 = vmatprep.subr.mxu0 0.0
    %1300 = vmatpush1.msra.mxu0 0.0
    %1301 = vmatprep.subr.mxu0 0.0
    %1302 = vmatpush1.msra.mxu0 0.0
    %1303 = vmatprep.subr.mxu0 0.0
    %1304 = vmatpush1.msra.mxu0 0.0
    %1305 = vmatprep.subr.mxu0 0.0
    %1306 = vmatpush1.msra.mxu0 0.0
    %1307 = vmatprep.subr.mxu0 0.0
    %1308 = vmatpush1.msra.mxu0 0.0
    %1309 = vmatprep.subr.mxu0 0.0
    %1310 = vmatpush1.msra.mxu0 0.0
    %1311 = vmatprep.subr.mxu0 0.0
    %1312 = vmatpush1.msra.mxu0 0.0
    %1313 = vmatprep.subr.mxu0 0.0
    %1314 = vmatpush1.msra.mxu0 0.0
    %1315 = vmatprep.mubr.f32.mxu0 0.0
    %1316 = vmatmul.mubr.f32.gmra.mrb[0].mxu0 %v1247
    %v1317 = vpop.f32.mrb[0].mxu0
    %v1318 = vadd.f32 0.0, %v1317
    %v1319 = vpop.f32.mrb[0].mxu0
    %1320 = vmatprep.mubr.f32.mxu0 0.0
    %1321 = vmatmul.mubr.f32.gmra.mrb[0].mxu0 %v1249
    %v1322 = vpop.f32.mrb[0].mxu0
    %v1323 = vadd.f32 0.0, %v1322
    %v1324 = vpop.f32.mrb[0].mxu0
    %1325 = vdwg.mxu0
    %1327 = vrot.lane.b32.xlu0 %v1318, 112
    %v1328 = vpop.permute.xlu0 %1327
    %v1329 = vsel %vm48, %v1318, 0
    %v1331 = vsel %vm48, %v1328, 0
    %1333 = vmatprep.subr.mxu0 0.0
    %1334 = vmatpush1.xpose.msra.mxu0 %v1331
    %1335 = vmatprep.subr.mxu0 0.0
    %1336 = vmatpush1.xpose.msra.mxu0 0.0
    %1337 = vmatprep.subr.mxu0 0.0
    %1338 = vmatpush1.xpose.msra.mxu0 0.0
    %1339 = vmatprep.subr.mxu0 0.0
    %1340 = vmatpush1.xpose.msra.mxu0 0.0
    %1341 = vmatprep.subr.mxu0 0.0
    %1342 = vmatpush1.xpose.msra.mxu0 0.0
    %1343 = vmatprep.subr.mxu0 0.0
    %1344 = vmatpush1.xpose.msra.mxu0 0.0
    %1345 = vmatprep.subr.mxu0 0.0
    %1346 = vmatpush1.xpose.msra.mxu0 0.0
    %1347 = vmatprep.subr.mxu0 0.0
    %1348 = vmatpush1.xpose.msra.mxu0 0.0
    %1349 = vmatprep.subr.mxu0 0.0
    %1350 = vmatpush1.xpose.msra.mxu0 0.0
    %1351 = vmatprep.subr.mxu0 0.0
    %1352 = vmatpush1.xpose.msra.mxu0 0.0
    %1353 = vmatprep.subr.mxu0 0.0
    %1354 = vmatpush1.xpose.msra.mxu0 0.0
    %1355 = vmatprep.subr.mxu0 0.0
    %1356 = vmatpush1.xpose.msra.mxu0 0.0
    %1357 = vmatprep.subr.mxu0 0.0
    %1358 = vmatpush1.xpose.msra.mxu0 0.0
    %1359 = vmatprep.subr.mxu0 0.0
    %1360 = vmatpush1.xpose.msra.mxu0 0.0
    %1361 = vmatprep.subr.mxu0 0.0
    %1362 = vmatpush1.xpose.msra.mxu0 0.0
    %1363 = vmatprep.subr.mxu0 0.0
    %1364 = vmatpush1.xpose.msra.mxu0 0.0
    %1365 = vmatprep.subr.mxu0 0.0
    %1366 = vmatpush1.xpose.msra.mxu0 0.0
    %1367 = vmatprep.subr.mxu0 0.0
    %1368 = vmatpush1.xpose.msra.mxu0 0.0
    %1369 = vmatprep.subr.mxu0 0.0
    %1370 = vmatpush1.xpose.msra.mxu0 0.0
    %1371 = vmatprep.subr.mxu0 0.0
    %1372 = vmatpush1.xpose.msra.mxu0 0.0
    %1373 = vmatprep.subr.mxu0 0.0
    %1374 = vmatpush1.xpose.msra.mxu0 0.0
    %1375 = vmatprep.subr.mxu0 0.0
    %1376 = vmatpush1.xpose.msra.mxu0 0.0
    %1377 = vmatprep.subr.mxu0 0.0
    %1378 = vmatpush1.xpose.msra.mxu0 0.0
    %1379 = vmatprep.subr.mxu0 0.0
    %1380 = vmatpush1.xpose.msra.mxu0 0.0
    %1381 = vmatprep.subr.mxu0 0.0
    %1382 = vmatpush1.xpose.msra.mxu0 0.0
    %1383 = vmatprep.subr.mxu0 0.0
    %1384 = vmatpush1.xpose.msra.mxu0 0.0
    %1385 = vmatprep.subr.mxu0 0.0
    %1386 = vmatpush1.xpose.msra.mxu0 0.0
    %1387 = vmatprep.subr.mxu0 0.0
    %1388 = vmatpush1.xpose.msra.mxu0 0.0
    %1389 = vmatprep.subr.mxu0 0.0
    %1390 = vmatpush1.xpose.msra.mxu0 0.0
    %1391 = vmatprep.subr.mxu0 0.0
    %1392 = vmatpush1.xpose.msra.mxu0 0.0
    %1393 = vmatprep.subr.mxu0 0.0
    %1394 = vmatpush1.xpose.msra.mxu0 0.0
    %1395 = vmatprep.subr.mxu0 0.0
    %1396 = vmatpush1.xpose.msra.mxu0 0.0
    %1397 = vmatprep.mubr.f32.mxu0 0.0
    %1398 = vmatmul.mubr.f32.gmra.mrb[0].mxu0 %v1329
    %v1399 = vpop.f32.mrb[0].mxu0
    %v1400 = vadd.f32 0.0, %v1399
    %v1401 = vpop.f32.mrb[0].mxu0
    %1402 = vdwg.mxu0
    %v1403 = vmul.f32 %v1400, 0.17677669
    %vm1404 = vcmask 64512
    %v1405 = vsel %vm1404, %v1403, -inf
    %1406 = vmax.xlane.f32.xlu0 %v1405
    %v1407 = vpop.xlane.xlu0 %1406
    %v1408 = vsub.f32 %v1403, %v1407
    %v1409 = vmul.f32 %v1408, 1.442695
    %v1410 = vpow.pop %v1409
    %v1411 = vsel %vm1404, %v1410, 0.0
    %1412 = vadd.xlane.f32.xlu0 %v1411
    %v1413 = vpop.xlane.xlu0 %1412
    %v1414 = vrcp.pop %v1413
    %v1415 = vmul.f32 %v1410, %v1414
    %1416 = vrot.lane.b32.xlu0 %v1318, 96
    %v1417 = vpop.permute.xlu0 %1416
    %v1420 = vsel %vm1404, %v1415, 0
    %1422 = vmatprep.subr.mxu0 0.0
    %1423 = vmatpush1.msra.mxu0 %v1417
    %1424 = vmatprep.subr.mxu0 0.0
    %1425 = vmatpush1.msra.mxu0 0.0
    %1426 = vmatprep.subr.mxu0 0.0
    %1427 = vmatpush1.msra.mxu0 0.0
    %1428 = vmatprep.subr.mxu0 0.0
    %1429 = vmatpush1.msra.mxu0 0.0
    %1430 = vmatprep.subr.mxu0 0.0
    %1431 = vmatpush1.msra.mxu0 0.0
    %1432 = vmatprep.subr.mxu0 0.0
    %1433 = vmatpush1.msra.mxu0 0.0
    %1434 = vmatprep.subr.mxu0 0.0
    %1435 = vmatpush1.msra.mxu0 0.0
    %1436 = vmatprep.subr.mxu0 0.0
    %1437 = vmatpush1.msra.mxu0 0.0
    %1438 = vmatprep.subr.mxu0 0.0
    %1439 = vmatpush1.msra.mxu0 0.0
    %1440 = vmatprep.subr.mxu0 0.0
    %1441 = vmatpush1.msra.mxu0 0.0
    %1442 = vmatprep.subr.mxu0 0.0
    %1443 = vmatpush1.msra.mxu0 0.0
    %1444 = vmatprep.subr.mxu0 0.0
    %1445 = vmatpush1.msra.mxu0 0.0
    %1446 = vmatprep.subr.mxu0 0.0
    %1447 = vmatpush1.msra.mxu0 0.0
    %1448 = vmatprep.subr.mxu0 0.0
    %1449 = vmatpush1.msra.mxu0 0.0
    %1450 = vmatprep.subr.mxu0 0.0
    %1451 = vmatpush1.msra.mxu0 0.0
    %1452 = vmatprep.subr.mxu0 0.0
    %1453 = vmatpush1.msra.mxu0 0.0
    %1454 = vmatprep.subr.mxu0 0.0
    %1455 = vmatpush1.msra.mxu0 0.0
    %1456 = vmatprep.subr.mxu0 0.0
    %1457 = vmatpush1.msra.mxu0 0.0
    %1458 = vmatprep.subr.mxu0 0.0
    %1459 = vmatpush1.msra.mxu0 0.0
    %1460 = vmatprep.subr.mxu0 0.0
    %1461 = vmatpush1.msra.mxu0 0.0
    %1462 = vmatprep.subr.mxu0 0.0
    %1463 = vmatpush1.msra.mxu0 0.0
    %1464 = vmatprep.subr.mxu0 0.0
    %1465 = vmatpush1.msra.mxu0 0.0
    %1466 = vmatprep.subr.mxu0 0.0
    %1467 = vmatpush1.msra.mxu0 0.0
    %1468 = vmatprep.subr.mxu0 0.0
    %1469 = vmatpush1.msra.mxu0 0.0
    %1470 = vmatprep.subr.mxu0 0.0
    %1471 = vmatpush1.msra.mxu0 0.0
    %1472 = vmatprep.subr.mxu0 0.0
    %1473 = vmatpush1.msra.mxu0 0.0
    %1474 = vmatprep.subr.mxu0 0.0
    %1475 = vmatpush1.msra.mxu0 0.0
    %1476 = vmatprep.subr.mxu0 0.0
    %1477 = vmatpush1.msra.mxu0 0.0
    %1478 = vmatprep.subr.mxu0 0.0
    %1479 = vmatpush1.msra.mxu0 0.0
    %1480 = vmatprep.subr.mxu0 0.0
    %1481 = vmatpush1.msra.mxu0 0.0
    %1482 = vmatprep.subr.mxu0 0.0
    %1483 = vmatpush1.msra.mxu0 0.0
    %1484 = vmatprep.subr.mxu0 0.0
    %1485 = vmatpush1.msra.mxu0 0.0
    %1486 = vmatprep.mubr.f32.mxu0 0.0
    %1487 = vmatmul.mubr.f32.gmra.mrb[0].mxu0 %v1420
    %v1488 = vpop.f32.mrb[0].mxu0
    %v1489 = vadd.f32 0.0, %v1488
    %v1490 = vpop.f32.mrb[0].mxu0
    %1491 = vdwg.mxu0
    %1493 = vrot.lane.b32.xlu0 %v1323, 112
    %v1494 = vpop.permute.xlu0 %1493
    %v1495 = vsel %vm48, %v1323, 0
    %v1497 = vsel %vm48, %v1494, 0
    %1499 = vmatprep.subr.mxu0 0.0
    %1500 = vmatpush1.xpose.msra.mxu0 %v1497
    %1501 = vmatprep.subr.mxu0 0.0
    %1502 = vmatpush1.xpose.msra.mxu0 0.0
    %1503 = vmatprep.subr.mxu0 0.0
    %1504 = vmatpush1.xpose.msra.mxu0 0.0
    %1505 = vmatprep.subr.mxu0 0.0
    %1506 = vmatpush1.xpose.msra.mxu0 0.0
    %1507 = vmatprep.subr.mxu0 0.0
    %1508 = vmatpush1.xpose.msra.mxu0 0.0
    %1509 = vmatprep.subr.mxu0 0.0
    %1510 = vmatpush1.xpose.msra.mxu0 0.0
    %1511 = vmatprep.subr.mxu0 0.0
    %1512 = vmatpush1.xpose.msra.mxu0 0.0
    %1513 = vmatprep.subr.mxu0 0.0
    %1514 = vmatpush1.xpose.msra.mxu0 0.0
    %1515 = vmatprep.subr.mxu0 0.0
    %1516 = vmatpush1.xpose.msra.mxu0 0.0
    %1517 = vmatprep.subr.mxu0 0.0
    %1518 = vmatpush1.xpose.msra.mxu0 0.0
    %1519 = vmatprep.subr.mxu0 0.0
    %1520 = vmatpush1.xpose.msra.mxu0 0.0
    %1521 = vmatprep.subr.mxu0 0.0
    %1522 = vmatpush1.xpose.msra.mxu0 0.0
    %1523 = vmatprep.subr.mxu0 0.0
    %1524 = vmatpush1.xpose.msra.mxu0 0.0
    %1525 = vmatprep.subr.mxu0 0.0
    %1526 = vmatpush1.xpose.msra.mxu0 0.0
    %1527 = vmatprep.subr.mxu0 0.0
    %1528 = vmatpush1.xpose.msra.mxu0 0.0
    %1529 = vmatprep.subr.mxu0 0.0
    %1530 = vmatpush1.xpose.msra.mxu0 0.0
    %1531 = vmatprep.subr.mxu0 0.0
    %1532 = vmatpush1.xpose.msra.mxu0 0.0
    %1533 = vmatprep.subr.mxu0 0.0
    %1534 = vmatpush1.xpose.msra.mxu0 0.0
    %1535 = vmatprep.subr.mxu0 0.0
    %1536 = vmatpush1.xpose.msra.mxu0 0.0
    %1537 = vmatprep.subr.mxu0 0.0
    %1538 = vmatpush1.xpose.msra.mxu0 0.0
    %1539 = vmatprep.subr.mxu0 0.0
    %1540 = vmatpush1.xpose.msra.mxu0 0.0
    %1541 = vmatprep.subr.mxu0 0.0
    %1542 = vmatpush1.xpose.msra.mxu0 0.0
    %1543 = vmatprep.subr.mxu0 0.0
    %1544 = vmatpush1.xpose.msra.mxu0 0.0
    %1545 = vmatprep.subr.mxu0 0.0
    %1546 = vmatpush1.xpose.msra.mxu0 0.0
    %1547 = vmatprep.subr.mxu0 0.0
    %1548 = vmatpush1.xpose.msra.mxu0 0.0
    %1549 = vmatprep.subr.mxu0 0.0
    %1550 = vmatpush1.xpose.msra.mxu0 0.0
    %1551 = vmatprep.subr.mxu0 0.0
    %1552 = vmatpush1.xpose.msra.mxu0 0.0
    %1553 = vmatprep.subr.mxu0 0.0
    %1554 = vmatpush1.xpose.msra.mxu0 0.0
    %1555 = vmatprep.subr.mxu0 0.0
    %1556 = vmatpush1.xpose.msra.mxu0 0.0
    %1557 = vmatprep.subr.mxu0 0.0
    %1558 = vmatpush1.xpose.msra.mxu0 0.0
    %1559 = vmatprep.subr.mxu0 0.0
    %1560 = vmatpush1.xpose.msra.mxu0 0.0
    %1561 = vmatprep.subr.mxu0 0.0
    %1562 = vmatpush1.xpose.msra.mxu0 0.0
    %1563 = vmatprep.mubr.f32.mxu0 0.0
    %1564 = vmatmul.mubr.f32.gmra.mrb[0].mxu0 %v1495
    %v1565 = vpop.f32.mrb[0].mxu0
    %v1566 = vadd.f32 0.0, %v1565
    %v1567 = vpop.f32.mrb[0].mxu0
    %1568 = vdwg.mxu0
    %v1569 = vmul.f32 %v1566, 0.17677669
    %v1570 = vsel %vm1404, %v1569, -inf
    %1571 = vmax.xlane.f32.xlu0 %v1570
    %v1572 = vpop.xlane.xlu0 %1571
    %v1573 = vsub.f32 %v1569, %v1572
    %v1574 = vmul.f32 %v1573, 1.442695
    %v1575 = vpow.pop %v1574
    %v1576 = vsel %vm1404, %v1575, 0.0
    %1577 = vadd.xlane.f32.xlu0 %v1576
    %v1578 = vpop.xlane.xlu0 %1577
    %v1579 = vrcp.pop %v1578
    %v1580 = vmul.f32 %v1575, %v1579
    %1581 = vrot.lane.b32.xlu0 %v1323, 96
    %v1582 = vpop.permute.xlu0 %1581
    %v1585 = vsel %vm1404, %v1580, 0
    %1587 = vmatprep.subr.mxu0 0.0
    %1588 = vmatpush1.msra.mxu0 %v1582
    %1589 = vmatprep.subr.mxu0 0.0
    %1590 = vmatpush1.msra.mxu0 0.0
    %1591 = vmatprep.subr.mxu0 0.0
    %1592 = vmatpush1.msra.mxu0 0.0
    %1593 = vmatprep.subr.mxu0 0.0
    %1594 = vmatpush1.msra.mxu0 0.0
    %1595 = vmatprep.subr.mxu0 0.0
    %1596 = vmatpush1.msra.mxu0 0.0
    %1597 = vmatprep.subr.mxu0 0.0
    %1598 = vmatpush1.msra.mxu0 0.0
    %1599 = vmatprep.subr.mxu0 0.0
    %1600 = vmatpush1.msra.mxu0 0.0
    %1601 = vmatprep.subr.mxu0 0.0
    %1602 = vmatpush1.msra.mxu0 0.0
    %1603 = vmatprep.subr.mxu0 0.0
    %1604 = vmatpush1.msra.mxu0 0.0
    %1605 = vmatprep.subr.mxu0 0.0
    %1606 = vmatpush1.msra.mxu0 0.0
    %1607 = vmatprep.subr.mxu0 0.0
    %1608 = vmatpush1.msra.mxu0 0.0
    %1609 = vmatprep.subr.mxu0 0.0
    %1610 = vmatpush1.msra.mxu0 0.0
    %1611 = vmatprep.subr.mxu0 0.0
    %1612 = vmatpush1.msra.mxu0 0.0
    %1613 = vmatprep.subr.mxu0 0.0
    %1614 = vmatpush1.msra.mxu0 0.0
    %1615 = vmatprep.subr.mxu0 0.0
    %1616 = vmatpush1.msra.mxu0 0.0
    %1617 = vmatprep.subr.mxu0 0.0
    %1618 = vmatpush1.msra.mxu0 0.0
    %1619 = vmatprep.subr.mxu0 0.0
    %1620 = vmatpush1.msra.mxu0 0.0
    %1621 = vmatprep.subr.mxu0 0.0
    %1622 = vmatpush1.msra.mxu0 0.0
    %1623 = vmatprep.subr.mxu0 0.0
    %1624 = vmatpush1.msra.mxu0 0.0
    %1625 = vmatprep.subr.mxu0 0.0
    %1626 = vmatpush1.msra.mxu0 0.0
    %1627 = vmatprep.subr.mxu0 0.0
    %1628 = vmatpush1.msra.mxu0 0.0
    %1629 = vmatprep.subr.mxu0 0.0
    %1630 = vmatpush1.msra.mxu0 0.0
    %1631 = vmatprep.subr.mxu0 0.0
    %1632 = vmatpush1.msra.mxu0 0.0
    %1633 = vmatprep.subr.mxu0 0.0
    %1634 = vmatpush1.msra.mxu0 0.0
    %1635 = vmatprep.subr.mxu0 0.0
    %1636 = vmatpush1.msra.mxu0 0.0
    %1637 = vmatprep.subr.mxu0 0.0
    %1638 = vmatpush1.msra.mxu0 0.0
    %1639 = vmatprep.subr.mxu0 0.0
    %1640 = vmatpush1.msra.mxu0 0.0
    %1641 = vmatprep.subr.mxu0 0.0
    %1642 = vmatpush1.msra.mxu0 0.0
    %1643 = vmatprep.subr.mxu0 0.0
    %1644 = vmatpush1.msra.mxu0 0.0
    %1645 = vmatprep.subr.mxu0 0.0
    %1646 = vmatpush1.msra.mxu0 0.0
    %1647 = vmatprep.subr.mxu0 0.0
    %1648 = vmatpush1.msra.mxu0 0.0
    %1649 = vmatprep.subr.mxu0 0.0
    %1650 = vmatpush1.msra.mxu0 0.0
    %1651 = vmatprep.mubr.f32.mxu0 0.0
    %1652 = vmatmul.mubr.f32.gmra.mrb[0].mxu0 %v1585
    %v1653 = vpop.f32.mrb[0].mxu0
    %v1654 = vadd.f32 0.0, %v1653
    %v1655 = vpop.f32.mrb[0].mxu0
    %1656 = vdwg.mxu0
    %v1657 = vld [vmem:[%s7] sm:$0xff]
    %v1658 = vld [vmem:[%s7 + $0x8] sm:$0xff]
    %v1662 = vsel %vm48, %v1489, 0
    %v1665 = vsel %vm48, %v1654, 0
    %1667 = vmatprep.subr.mxu0 0.0
    %1668 = vmatpush1.msra.mxu0 %v1657
    %1669 = vmatprep.subr.mxu0 0.0
    %1670 = vmatpush1.msra.mxu0 %v1658
    %1671 = vmatprep.subr.mxu0 0.0
    %1672 = vmatpush1.msra.mxu0 0.0
    %1673 = vmatprep.subr.mxu0 0.0
    %1674 = vmatpush1.msra.mxu0 0.0
    %1675 = vmatprep.subr.mxu0 0.0
    %1676 = vmatpush1.msra.mxu0 0.0
    %1677 = vmatprep.subr.mxu0 0.0
    %1678 = vmatpush1.msra.mxu0 0.0
    %1679 = vmatprep.subr.mxu0 0.0
    %1680 = vmatpush1.msra.mxu0 0.0
    %1681 = vmatprep.subr.mxu0 0.0
    %1682 = vmatpush1.msra.mxu0 0.0
    %1683 = vmatprep.subr.mxu0 0.0
    %1684 = vmatpush1.msra.mxu0 0.0
    %1685 = vmatprep.subr.mxu0 0.0
    %1686 = vmatpush1.msra.mxu0 0.0
    %1687 = vmatprep.subr.mxu0 0.0
    %1688 = vmatpush1.msra.mxu0 0.0
    %1689 = vmatprep.subr.mxu0 0.0
    %1690 = vmatpush1.msra.mxu0 0.0
    %1691 = vmatprep.subr.mxu0 0.0
    %1692 = vmatpush1.msra.mxu0 0.0
    %1693 = vmatprep.subr.mxu0 0.0
    %1694 = vmatpush1.msra.mxu0 0.0
    %1695 = vmatprep.subr.mxu0 0.0
    %1696 = vmatpush1.msra.mxu0 0.0
    %1697 = vmatprep.subr.mxu0 0.0
    %1698 = vmatpush1.msra.mxu0 0.0
    %1699 = vmatprep.subr.mxu0 0.0
    %1700 = vmatpush1.msra.mxu0 0.0
    %1701 = vmatprep.subr.mxu0 0.0
    %1702 = vmatpush1.msra.mxu0 0.0
    %1703 = vmatprep.subr.mxu0 0.0
    %1704 = vmatpush1.msra.mxu0 0.0
    %1705 = vmatprep.subr.mxu0 0.0
    %1706 = vmatpush1.msra.mxu0 0.0
    %1707 = vmatprep.subr.mxu0 0.0
    %1708 = vmatpush1.msra.mxu0 0.0
    %1709 = vmatprep.subr.mxu0 0.0
    %1710 = vmatpush1.msra.mxu0 0.0
    %1711 = vmatprep.subr.mxu0 0.0
    %1712 = vmatpush1.msra.mxu0 0.0
    %1713 = vmatprep.subr.mxu0 0.0
    %1714 = vmatpush1.msra.mxu0 0.0
    %1715 = vmatprep.subr.mxu0 0.0
    %1716 = vmatpush1.msra.mxu0 0.0
    %1717 = vmatprep.subr.mxu0 0.0
    %1718 = vmatpush1.msra.mxu0 0.0
    %1719 = vmatprep.subr.mxu0 0.0
    %1720 = vmatpush1.msra.mxu0 0.0
    %1721 = vmatprep.subr.mxu0 0.0
    %1722 = vmatpush1.msra.mxu0 0.0
    %1723 = vmatprep.subr.mxu0 0.0
    %1724 = vmatpush1.msra.mxu0 0.0
    %1725 = vmatprep.subr.mxu0 0.0
    %1726 = vmatpush1.msra.mxu0 0.0
    %1727 = vmatprep.subr.mxu0 0.0
    %1728 = vmatpush1.msra.mxu0 0.0
    %1729 = vmatprep.subr.mxu0 0.0
    %1730 = vmatpush1.msra.mxu0 0.0
    %1731 = vmatprep.mubr.f32.mxu0 0.0
    %1732 = vmatmul.mubr.f32.gmra.mrb[0].mxu0 %v1662
    %v1733 = vpop.f32.mrb[0].mxu0
    %v1734 = vadd.f32 %v1244, %v1733
    %v1735 = vpop.f32.mrb[0].mxu0
    %1736 = vmatprep.mubr.f32.mxu0 0.0
    %1737 = vmatmul.mubr.f32.gmra.mrb[0].mxu0 %v1665
    %v1738 = vpop.f32.mrb[0].mxu0
    %v1739 = vadd.f32 %v1246, %v1738
    %v1740 = vpop.f32.mrb[0].mxu0
    %1741 = vdwg.mxu0
    %v1742 = vsel %vm192, %v1734, 0.0
    %1743 = vadd.xlane.f32.xlu0 %v1742
    %v1744 = vpop.xlane.xlu0 %1743
    %v1745 = vsel %vm192, %v1739, 0.0
    %1746 = vadd.xlane.f32.xlu0 %v1745
    %v1747 = vpop.xlane.xlu0 %1746
    %v1748 = vmul.f32 %v1744, %v1186
    %v1749 = vmul.f32 %v1747, %v1186
    %v1750 = vsub.f32 %v1734, %v1748
    %v1751 = vsub.f32 %v1739, %v1749
    %v1752 = vmul.f32 %v1750, %v1750
    %v1753 = vmul.f32 %v1751, %v1751
    %v1754 = vsel %vm192, %v1752, 0.0
    %1755 = vadd.xlane.f32.xlu0 %v1754
    %v1756 = vpop.xlane.xlu0 %1755
    %v1757 = vsel %vm192, %v1753, 0.0
    %1758 = vadd.xlane.f32.xlu0 %v1757
    %v1759 = vpop.xlane.xlu0 %1758
    %v1760 = vmul.f32 %v1756, %v1186
    %v1761 = vmul.f32 %v1759, %v1186
    %v1762 = vadd.f32 %v1760, 1e-05
    %v1763 = vadd.f32 %v1761, 1e-05
    %v1764 = vrsqrt.pop %v1762
    %v1765 = vrsqrt.pop %v1763
    %v1766 = vmul.f32 %v1750, %v1764
    %v1767 = vmul.f32 %v1751, %v1765
    %v1768 = vmul.f32 %v1766, %v1219
    %v1769 = vmul.f32 %v1767, %v1219
    %v1770 = vadd.f32 %v1768, %v1230
    %v1771 = vadd.f32 %v1769, %v1230
    %v1772 = vsel %vm192, %v1770, 0.0
    %v1773 = vrot.slane %v1772, 4
    %v1774 = vadd.f32 %v1772, %v1773
    %v1775 = vrot.slane %v1774, 2
    %v1776 = vadd.f32 %v1774, %v1775
    %v1777 = vrot.slane %v1776, 1
    %v1778 = vadd.f32 %v1776, %v1777
    %v1779 = vrcp.pop 8.0
    %v1780 = vmul.f32 %v1778, %v1779
    %v1781 = vsel %vm192, %v1771, 0.0
    %v1782 = vrot.slane %v1781, 4
    %v1783 = vadd.f32 %v1781, %v1782
    %v1784 = vrot.slane %v1783, 2
    %v1785 = vadd.f32 %v1783, %v1784
    %v1786 = vrot.slane %v1785, 1
    %v1787 = vadd.f32 %v1785, %v1786
    %v1788 = vmul.f32 %v1787, %v1779
    %v1789 = vsel %vm160, %v1780, %v1788
    %vm1790 = vcmask 254976
    %1791 = vst.msk [vmem:[#allocation2] sm:$0x3] %vm1790, %v1789
    // Predicated region
    $region42: #{res_attn_lstm_forward.1} parent=1 // pred_check
      _
    $region43: #{res_attn_lstm_forward.1} parent=1 // pred_check_branch
      %1793 = sbr.rel (0) target = $region45
    $region44: #{res_attn_lstm_forward.1} parent=1 // pred_region
      %s1795 = ssub.s32 32, 32
      %1796 = vsyncadd [#allocation3], %s1795
      %s1798 = sshll.u32 [#allocation2], 4
      %s1799 = int_to_ptr.vmem [resolvable:$true] %s1798
      %1801 = dma.vmem_to_hbm [thread:$0]  %s1799, 32, %s10, [#allocation3]
    $region45: #{res_attn_lstm_forward.1} parent=1 // pred_fallthru
      _
    // Predicated region
    $region46: #{res_attn_lstm_forward.1} parent=1 // pred_check
      _
    $region47: #{res_attn_lstm_forward.1} parent=1 // pred_check_branch
      %1803 = sbr.rel (0) target = $region49
    $region48: #{res_attn_lstm_forward.1} parent=1 // pred_region
      %1804 = dma.done [#allocation3], 32
    $region49: #{res_attn_lstm_forward.1} parent=1 // pred_fallthru
      _
    %1805 = vsyncpa [#allocation3], 1

</llo_original>
